<compile_context>
chip_gen: v7x
topology: tpu7x:2x2x1
jax: 0.10.0
libtpu: 0.0.40
codegen_flags: <defaults>
</compile_context>

<pallas_src>
import math

import jax
import jax.numpy as jnp
from jax.experimental import pallas as pl
from jax.experimental.pallas import tpu as pltpu

EPS = 1e-5        # torch.nn.BatchNorm eps
NORM_EPS = 1e-12  # torch.nn.functional.normalize eps


# ----------------------------------------------------------------------------
# VMEM-aware sizing
# ----------------------------------------------------------------------------
def _tpu_vmem_capacity():
    try:
        return int(pltpu.get_tpu_info().vmem_capacity_bytes)
    except Exception:
        return 64 * 1024 * 1024          # conservative fallback (v7x per-TC VMEM)


_VMEM_CAP = _tpu_vmem_capacity()
_VMEM_LIMIT = int(min(_VMEM_CAP * 3 // 4, 100 * 1024 * 1024))
_BLOCK_BUDGET = int(max(2 * 1024 * 1024, _VMEM_CAP // 16))   # per double-buffered operand


def _cparams(semantics):
    return pltpu.CompilerParams(dimension_semantics=semantics,
                                vmem_limit_bytes=_VMEM_LIMIT)


def _pick_tile(n, target):
    """Largest multiple-of-8 divisor of n that is <= target (falls back to n,
    which is always a legal block dim since it equals the full array dim)."""
    target = int(min(n, max(8, target)))
    if n <= target:
        return n
    for cand in range(target, 7, -1):
        if n % cand == 0 and cand % 8 == 0:
            return cand
    return n


def _pick_pow2_tile(n, target):
    t = 1 << max(7, int(max(1, target)).bit_length() - 1)
    t = min(t, n)
    while n % t != 0 and t > 128:
        t //= 2
    return t


# ----------------------------------------------------------------------------
# Kernel 1: fused STN3d per-point MLP (3 -> 64 -> 128 -> 1024, no BN) + point
#           max-pool into a resident per-batch (1, 1024) output block.
#           Grid (B, tiles): batch is 'parallel', tiles are 'arbitrary'.
# ----------------------------------------------------------------------------
def stn_mlp_maxpool(x, w1, b1, w2, b2, w3, b3, *, tm):
    B, N, _ = x.shape
    F_ = w3.shape[1]
    assert N % tm == 0
    T = N // tm

    def kernel(x_ref, w1_ref, b1_ref, w2_ref, b2_ref, w3_ref, b3_ref, o_ref):
        t = pl.program_id(1)
        h = jnp.maximum(jnp.dot(x_ref[0], w1_ref[...],
                                preferred_element_type=jnp.float32) + b1_ref[...], 0.0)
        h = jnp.maximum(jnp.dot(h, w2_ref[...],
                                preferred_element_type=jnp.float32) + b2_ref[...], 0.0)
        h = jnp.maximum(jnp.dot(h, w3_ref[...],
                                preferred_element_type=jnp.float32) + b3_ref[...], 0.0)
        m = jnp.max(h, axis=0, keepdims=True)                  # (1, 1024)

        @pl.when(t == 0)
        def _():
            o_ref[0] = m

        @pl.when(t > 0)
        def _():
            o_ref[0] = jnp.maximum(o_ref[0], m)

    out = pl.pallas_call(
        kernel,
        out_shape=jax.ShapeDtypeStruct((B, 1, F_), jnp.float32),
        grid_spec=pltpu.PrefetchScalarGridSpec(
            num_scalar_prefetch=0,
            grid=(B, T),
            in_specs=[pl.BlockSpec((1, tm, 3), lambda b, t: (b, t, 0)),
                      pl.BlockSpec(w1.shape, lambda b, t: (0, 0)),
                      pl.BlockSpec(b1.shape, lambda b, t: (0, 0)),
                      pl.BlockSpec(w2.shape, lambda b, t: (0, 0)),
                      pl.BlockSpec(b2.shape, lambda b, t: (0, 0)),
                      pl.BlockSpec(w3.shape, lambda b, t: (0, 0)),
                      pl.BlockSpec(b3.shape, lambda b, t: (0, 0))],
            out_specs=pl.BlockSpec((1, 1, F_), lambda b, t: (b, 0, 0))),
        compiler_params=_cparams(("parallel", "arbitrary")),
    )(x, w1, b1, w2, b2, w3, b3)
    return out.reshape(B, F_)


# ----------------------------------------------------------------------------
# Kernel 2: per-point [BN(prev)+ReLU ->] linear, writing the pre-BN activation
#           (optional) and accumulating per-batch sum / sum-of-squares.
#           One kernel per PointNetfeat conv layer; BN of layer i is applied as
#           a precomputed scale/shift inside layer i+1's kernel.
# ----------------------------------------------------------------------------
def pp_linear_stats(x, w, bias, *, scale=None, shift=None, batched_w=False,
                    write_y=True, tm):
    B, N, Cin = x.shape
    Cout = w.shape[-1]
    assert N % tm == 0
    T = N // tm
    norm_in = scale is not None

    def kernel(*refs):
        idx = 0
        x_ref = refs[idx]; idx += 1
        if norm_in:
            sc_ref, sh_ref = refs[idx], refs[idx + 1]; idx += 2
        w_ref, b_ref = refs[idx], refs[idx + 1]; idx += 2
        if write_y:
            y_ref = refs[idx]; idx += 1
        s_ref, q_ref = refs[idx], refs[idx + 1]

        t = pl.program_id(1)
        xv = x_ref[0]
        if norm_in:
            xv = jnp.maximum(xv * sc_ref[...] + sh_ref[...], 0.0)   # BN + ReLU
        wv = w_ref[0] if batched_w else w_ref[...]
        y = jnp.dot(xv, wv, preferred_element_type=jnp.float32) + b_ref[...]
        if write_y:
            y_ref[0] = y
        ts = jnp.sum(y, axis=0, keepdims=True)
        tq = jnp.sum(y * y, axis=0, keepdims=True)

        @pl.when(t == 0)
        def _():
            s_ref[0] = jnp.zeros_like(ts)
            q_ref[0] = jnp.zeros_like(tq)

        s_ref[0] += ts
        q_ref[0] += tq

    in_specs = [pl.BlockSpec((1, tm, Cin), lambda b, t: (b, t, 0))]
    args = [x]
    if norm_in:
        in_specs += [pl.BlockSpec((1, Cin), lambda b, t: (0, 0))] * 2
        args += [scale, shift]
    if batched_w:
        in_specs.append(pl.BlockSpec((1, Cin, Cout), lambda b, t: (b, 0, 0)))
    else:
        in_specs.append(pl.BlockSpec((Cin, Cout), lambda b, t: (0, 0)))
    in_specs.append(pl.BlockSpec((1, Cout), lambda b, t: (0, 0)))
    args += [w, bias]

    out_shapes, out_specs = [], []
    if write_y:
        out_shapes.append(jax.ShapeDtypeStruct((B, N, Cout), jnp.float32))
        out_specs.append(pl.BlockSpec((1, tm, Cout), lambda b, t: (b, t, 0)))
    out_shapes += [jax.ShapeDtypeStruct((B, 1, Cout), jnp.float32)] * 2
    out_specs += [pl.BlockSpec((1, 1, Cout), lambda b, t: (b, 0, 0))] * 2

    return pl.pallas_call(
        kernel,
        out_shape=tuple(out_shapes),
        grid_spec=pltpu.PrefetchScalarGridSpec(
            num_scalar_prefetch=0,
            grid=(B, T),
            in_specs=in_specs,
            out_specs=tuple(out_specs)),
        compiler_params=_cparams(("parallel", "arbitrary")),
    )(*args)


def _bn_affine(ssum_b, ssq_b, gamma, beta, count):
    """Per-batch partial (B,1,C) stats -> (1,C) scale/shift so BN is y*s+t."""
    s = jnp.sum(ssum_b, axis=0)
    q = jnp.sum(ssq_b, axis=0)
    mean = s / count
    var = jnp.maximum(q / count - mean * mean, 0.0)
    scale = gamma * jax.lax.rsqrt(var + EPS)
    shift = beta - mean * scale
    return scale, shift


# ----------------------------------------------------------------------------
# Kernel 3: recompute conv5 from y4, apply BN5 (no ReLU), write feat in bf16 and
#           simultaneously accumulate the NetVLAD soft-assignment BN statistics
#           (act = feat @ cluster_w).  Removes a full read of feat for stats.
# ----------------------------------------------------------------------------
def feat_netvlad_stats(y4, scale4, shift4, w5, b5, scale5, shift5, cluster_w, *, tm):
    B, N, C4 = y4.shape
    F_ = w5.shape[1]
    K_ = cluster_w.shape[1]
    assert N % tm == 0
    T = N // tm

    def kernel(y4_ref, sc4_ref, sh4_ref, w5_ref, b5_ref, sc5_ref, sh5_ref,
               cw_ref, feat_ref, s_ref, q_ref):
        t = pl.program_id(1)
        z4 = jnp.maximum(y4_ref[0] * sc4_ref[...] + sh4_ref[...], 0.0)
        y5 = jnp.dot(z4, w5_ref[...], preferred_element_type=jnp.float32) + b5_ref[...]
        feat = y5 * sc5_ref[...] + sh5_ref[...]              # BN5, no ReLU
        feat_bf = feat.astype(jnp.bfloat16)
        feat_ref[0] = feat_bf
        # act computed from the bf16-rounded feat so BN1 stats match what the
        # aggregation kernel will actually see.
        act = jnp.dot(feat_bf.astype(jnp.float32), cw_ref[...],
                      preferred_element_type=jnp.float32)     # (tm, K)
        ts = jnp.sum(act, axis=0, keepdims=True)
        tq = jnp.sum(act * act, axis=0, keepdims=True)

        @pl.when(t == 0)
        def _():
            s_ref[0] = jnp.zeros_like(ts)
            q_ref[0] = jnp.zeros_like(tq)

        s_ref[0] += ts
        q_ref[0] += tq

    return pl.pallas_call(
        kernel,
        out_shape=(jax.ShapeDtypeStruct((B, N, F_), jnp.bfloat16),
                   jax.ShapeDtypeStruct((B, 1, K_), jnp.float32),
                   jax.ShapeDtypeStruct((B, 1, K_), jnp.float32)),
        grid_spec=pltpu.PrefetchScalarGridSpec(
            num_scalar_prefetch=0,
            grid=(B, T),
            in_specs=[pl.BlockSpec((1, tm, C4), lambda b, t: (b, t, 0)),
                      pl.BlockSpec((1, C4), lambda b, t: (0, 0)),
                      pl.BlockSpec((1, C4), lambda b, t: (0, 0)),
                      pl.BlockSpec((C4, F_), lambda b, t: (0, 0)),
                      pl.BlockSpec((1, F_), lambda b, t: (0, 0)),
                      pl.BlockSpec((1, F_), lambda b, t: (0, 0)),
                      pl.BlockSpec((1, F_), lambda b, t: (0, 0)),
                      pl.BlockSpec((F_, K_), lambda b, t: (0, 0))],
            out_specs=(pl.BlockSpec((1, tm, F_), lambda b, t: (b, t, 0)),
                       pl.BlockSpec((1, 1, K_), lambda b, t: (b, 0, 0)),
                       pl.BlockSpec((1, 1, K_), lambda b, t: (b, 0, 0)))),
        compiler_params=_cparams(("parallel", "arbitrary")),
    )(y4, scale4, shift4, w5, b5, scale5, shift5, cluster_w)


# ----------------------------------------------------------------------------
# Kernel 4: NetVLAD aggregation, streamed over point tiles per batch.
#           BN (hoisted scale/shift) -> softmax (approx reciprocal) ->
#           accumulate a_sum and vlad into a resident (1, K, F) block;
#           a_sum*cluster_w2, intra- and L2-normalization fused into the final
#           grid step.  Grid (B, tiles): batch 'parallel', tiles 'arbitrary'.
# ----------------------------------------------------------------------------
def netvlad_agg(feat, cluster_w, cw2_t, act_scale, act_shift, *, tn):
    B, N, F_ = feat.shape
    K_ = cluster_w.shape[1]
    assert N % tn == 0
    T = N // tn

    def kernel(x_ref, cw_ref, cw2t_ref, sc_ref, sh_ref, o_ref, asum_ref):
        t = pl.program_id(1)

        @pl.when(t == 0)
        def _():
            o_ref[...] = jnp.zeros_like(o_ref)
            asum_ref[...] = jnp.zeros_like(asum_ref)

        xv = x_ref[0].astype(jnp.float32)                          # (tn, F)
        act = jnp.dot(xv, cw_ref[...], preferred_element_type=jnp.float32)
        act = act * sc_ref[...] + sh_ref[...]                      # BN1 (hoisted)
        act = act - jnp.max(act, axis=-1, keepdims=True)
        act = jnp.exp(act)
        act = act * pl.reciprocal(jnp.sum(act, axis=-1, keepdims=True), approx=True)

        asum_ref[...] += jnp.sum(act, axis=0, keepdims=True)       # (1, K)
        # vlad[k, f] += sum_n act[n, k] * x[n, f]
        o_ref[0] += jax.lax.dot_general(act, xv, (((0,), (0,)), ((), ())),
                                        preferred_element_type=jnp.float32)

        @pl.when(t == T - 1)
        def _():
            a_col = jnp.transpose(asum_ref[...])                   # (K, 1)
            vlad = o_ref[0] - a_col * cw2t_ref[...]                # (K, F)
            # F.normalize(vlad, dim=1) on (B, F, K) == per-(b, k) norm over F
            n1 = jnp.sqrt(jnp.sum(vlad * vlad, axis=1, keepdims=True))
            vlad = vlad / jnp.maximum(n1, NORM_EPS)
            # F.normalize of the flattened (K*F,) vector
            n2 = jnp.sqrt(jnp.sum(vlad * vlad))
            o_ref[0] = vlad / jnp.maximum(n2, NORM_EPS)

    return pl.pallas_call(
        kernel,
        out_shape=jax.ShapeDtypeStruct((B, K_, F_), jnp.float32),
        grid_spec=pltpu.PrefetchScalarGridSpec(
            num_scalar_prefetch=0,
            grid=(B, T),
            in_specs=[pl.BlockSpec((1, tn, F_), lambda b, t: (b, t, 0)),
                      pl.BlockSpec((F_, K_), lambda b, t: (0, 0)),
                      pl.BlockSpec((K_, F_), lambda b, t: (0, 0)),
                      pl.BlockSpec((1, K_), lambda b, t: (0, 0)),
                      pl.BlockSpec((1, K_), lambda b, t: (0, 0))],
            out_specs=pl.BlockSpec((1, K_, F_), lambda b, t: (b, 0, 0)),
            scratch_shapes=[pltpu.VMEM((1, K_), jnp.float32)]),
        compiler_params=_cparams(("parallel", "arbitrary")),
    )(feat, cluster_w, cw2_t, act_scale, act_shift)


# ----------------------------------------------------------------------------
# Kernel 5: hidden1 matmul — K-chunked bf16 weight stream, f32 accumulation in a
#           resident output block.  Output dim is split into a leading
#           'parallel' axis so v7x's two TensorCores each stream half the 64K x D
#           weight matrix.  BN2 + context gating are a tiny (B, D) epilogue done
#           in plain XLA by the wrapper.
# ----------------------------------------------------------------------------
def hidden_matmul(x, w_bf16):
    Bm, KF = x.shape
    D = w_bf16.shape[1]
    nd = 2 if (D % 256 == 0) else 1
    Dp = D // nd
    tk = _pick_pow2_tile(KF, max(512, _BLOCK_BUDGET // (4 * Dp)))
    nk = KF // tk

    def kernel(x_ref, w_ref, o_ref):
        k = pl.program_id(1)

        @pl.when(k == 0)
        def _():
            o_ref[...] = jnp.zeros_like(o_ref)

        o_ref[...] += jnp.dot(x_ref[...].astype(jnp.bfloat16), w_ref[...],
                              preferred_element_type=jnp.float32)

    return pl.pallas_call(
        kernel,
        out_shape=jax.ShapeDtypeStruct((Bm, D), jnp.float32),
        grid_spec=pltpu.PrefetchScalarGridSpec(
            num_scalar_prefetch=0,
            grid=(nd, nk),
            in_specs=[pl.BlockSpec((Bm, tk), lambda d, k: (0, k)),
                      pl.BlockSpec((tk, Dp), lambda d, k: (k, d))],
            out_specs=pl.BlockSpec((Bm, Dp), lambda d, k: (0, d))),
        compiler_params=_cparams(("parallel", "arbitrary")),
    )(x, w_bf16)


# ----------------------------------------------------------------------------
# Tiny XLA helpers (negligible work: (B, C) tensors only)
# ----------------------------------------------------------------------------
def _bn_train(y, g, b):
    mean = jnp.mean(y, axis=0, keepdims=True)
    var = jnp.mean((y - mean) ** 2, axis=0, keepdims=True)
    return (y - mean) * jax.lax.rsqrt(var + EPS) * g + b


# ----------------------------------------------------------------------------
# Full forward pass
# ----------------------------------------------------------------------------
def pointnetvlad_forward(x_pts, p, row_tile_target=None, nv_tile_target=None):
    """x_pts: (B, N, 3) float32 point clouds -> (B, output_dim) descriptors."""
    B, N, _ = x_pts.shape
    F_ = p['pf_c5_w'].shape[1]
    K_ = p['cluster_w'].shape[1]
    M = B * N
    cnt = float(M)

    if row_tile_target is None:
        row_tile_target = max(128, min(1024, _BLOCK_BUDGET // (4 * F_)))
    if nv_tile_target is None:
        nv_tile_target = row_tile_target
    tm = _pick_tile(N, row_tile_target)
    tn = _pick_tile(N, nv_tile_target)

    # ---------------- STN3d (k=3, use_bn=False): fused MLP + maxpool ---------
    g = stn_mlp_maxpool(x_pts, p['stn_c1_w'], p['stn_c1_b'],
                        p['stn_c2_w'], p['stn_c2_b'],
                        p['stn_c3_w'], p['stn_c3_b'], tm=tm)          # (B, 1024)
    # tiny FC head in plain XLA (B rows only)
    g = jax.nn.relu(g @ p['stn_fc1_w'] + p['stn_fc1_b'])
    g = jax.nn.relu(g @ p['stn_fc2_w'] + p['stn_fc2_b'])
    g = g @ p['stn_fc3_w'] + p['stn_fc3_b']                           # == 0 (zero-init)
    trans = g.reshape(B, 3, 3) + jnp.eye(3, dtype=jnp.float32)[None]
    # Fold (x @ trans) @ W1 == x @ (trans @ W1): per-batch fused conv1 weight.
    w1_fused = jnp.einsum('bij,jk->bik', trans, p['pf_c1_w'])         # (B, 3, 64)

    # ---------------- PointNetfeat MLP (train-mode BN, single-write chain) ---
    y1, s1, q1 = pp_linear_stats(x_pts, w1_fused, p['pf_c1_b'],
                                 batched_w=True, tm=tm)
    sc1, sh1 = _bn_affine(s1, q1, p['pf_bn1_g'], p['pf_bn1_b'], cnt)

    y2, s2, q2 = pp_linear_stats(y1, p['pf_c2_w'], p['pf_c2_b'],
                                 scale=sc1, shift=sh1, tm=tm)
    sc2, sh2 = _bn_affine(s2, q2, p['pf_bn2_g'], p['pf_bn2_b'], cnt)

    y3, s3, q3 = pp_linear_stats(y2, p['pf_c3_w'], p['pf_c3_b'],
                                 scale=sc2, shift=sh2, tm=tm)
    sc3, sh3 = _bn_affine(s3, q3, p['pf_bn3_g'], p['pf_bn3_b'], cnt)

    y4, s4, q4 = pp_linear_stats(y3, p['pf_c4_w'], p['pf_c4_b'],
                                 scale=sc3, shift=sh3, tm=tm)
    sc4, sh4 = _bn_affine(s4, q4, p['pf_bn4_g'], p['pf_bn4_b'], cnt)

    # conv5 stats only — y5 is recomputed (never written to HBM)
    s5, q5 = pp_linear_stats(y4, p['pf_c5_w'], p['pf_c5_b'],
                             scale=sc4, shift=sh4, write_y=False, tm=tm)
    sc5, sh5 = _bn_affine(s5, q5, p['pf_bn5_g'], p['pf_bn5_b'], cnt)

    # feat = bn5(conv5(...)) in bf16, fused with NetVLAD BN1 statistics
    feat, as_, aq_ = feat_netvlad_stats(y4, sc4, sh4, p['pf_c5_w'], p['pf_c5_b'],
                                        sc5, sh5, p['cluster_w'], tm=tm)
    asc, ash = _bn_affine(as_, aq_, p['nv_bn1_g'], p['nv_bn1_b'], cnt)

    # ---------------- NetVLADLoupe ----------------
    vlad = netvlad_agg(feat, p['cluster_w'], jnp.transpose(p['cluster_w2']),
                       asc, ash, tn=tn)                               # (B, K, F)
    # lane-dense reshape, rows ordered k*F + f (hidden1_w is pre-permuted)
    vlad_flat = vlad.reshape(B, K_ * F_)

    h = hidden_matmul(vlad_flat, p['hidden1_w'])                      # (B, D) pre-BN
    # BN2 + context gating: tiny (B, D) epilogue in plain XLA
    y = _bn_train(h, p['nv_bn2_g'], p['nv_bn2_b'])
    gates = jax.nn.sigmoid(_bn_train(y @ p['gate_w'],
                                     p['gate_bn_g'], p['gate_bn_b']))
    return y * gates


# ----------------------------------------------------------------------------
# Deterministic parameter initialisation (shapes from the module __init__)
# ----------------------------------------------------------------------------
def init_params(key, output_dim):
    F_, K_ = 1024, 64
    ks = list(jax.random.split(key, 24))
    nxt = iter(ks)

    def rnd(shape, scale):
        return scale * jax.random.normal(next(nxt), shape, jnp.float32)

    def ones(c):
        return jnp.ones((1, c), jnp.float32)

    def zeros(c):
        return jnp.zeros((1, c), jnp.float32)

    p = {}
    # STN3d (k=3, use_bn=False)
    p['stn_c1_w'] = rnd((3, 64), 1 / math.sqrt(3));         p['stn_c1_b'] = rnd((1, 64), 0.01)
    p['stn_c2_w'] = rnd((64, 128), 1 / math.sqrt(64));      p['stn_c2_b'] = rnd((1, 128), 0.01)
    p['stn_c3_w'] = rnd((128, 1024), 1 / math.sqrt(128));   p['stn_c3_b'] = rnd((1, 1024), 0.01)
    p['stn_fc1_w'] = rnd((1024, 512), 1 / math.sqrt(1024)); p['stn_fc1_b'] = rnd((1, 512), 0.01)
    p['stn_fc2_w'] = rnd((512, 256), 1 / math.sqrt(512));   p['stn_fc2_b'] = rnd((1, 256), 0.01)
    p['stn_fc3_w'] = jnp.zeros((256, 9), jnp.float32)       # zero-init per module
    p['stn_fc3_b'] = jnp.zeros((1, 9), jnp.float32)
    # PointNetfeat convs + BN
    dims = [(3, 64), (64, 64), (64, 64), (64, 128), (128, 1024)]
    for i, (ci, co) in enumerate(dims, start=1):
        p[f'pf_c{i}_w'] = rnd((ci, co), 1 / math.sqrt(ci))
        p[f'pf_c{i}_b'] = rnd((1, co), 0.01)
        p[f'pf_bn{i}_g'] = ones(co)
        p[f'pf_bn{i}_b'] = zeros(co)
    # NetVLADLoupe
    p['cluster_w'] = rnd((F_, K_), 1 / math.sqrt(F_))
    p['cluster_w2'] = rnd((F_, K_), 1 / math.sqrt(F_))      # module shape (1, F, K), squeezed
    p['nv_bn1_g'] = ones(K_); p['nv_bn1_b'] = zeros(K_)
    # hidden1_weights streamed in bf16; rows stored in k*F + f order so the
    # lane-dense (B, K, F) NetVLAD output reshapes directly (a PyTorch
    # checkpoint, stored in f*K + k row order, must be permuted at load time:
    # w.reshape(F, K, D).transpose(1, 0, 2).reshape(K*F, D)).
    p['hidden1_w'] = rnd((K_ * F_, output_dim), 1 / math.sqrt(F_)).astype(jnp.bfloat16)
    p['nv_bn2_g'] = ones(output_dim); p['nv_bn2_b'] = zeros(output_dim)
    # GatingContext
    p['gate_w'] = rnd((output_dim, output_dim), 1 / math.sqrt(output_dim))
    p['gate_bn_g'] = ones(output_dim); p['gate_bn_b'] = zeros(output_dim)
    return p


if __name__ == "__main__":
    key = jax.random.PRNGKey(0)
    pkey, xkey = jax.random.split(key)

    B, N = 2, 256           # small num_points for the synthetic run
    OUTPUT_DIM = 256        # NetVLADLoupe output_dim (constructor arg)

    params = init_params(pkey, OUTPUT_DIM)
    x = jax.random.normal(xkey, (B, N, 3), jnp.float32)

    # small tile targets so the multi-step streamed/accumulating grid paths are
    # exercised even at this toy size (defaults are VMEM-budget derived)
    out = pointnetvlad_forward(x, params, row_tile_target=64, nv_tile_target=64)
    out = jax.block_until_ready(out)

    assert out.shape == (B, OUTPUT_DIM), out.shape
    assert bool(jnp.all(jnp.isfinite(out)))
    print("KERNEL_OK")
</pallas_src>

<mosaic_0001>
module attributes {stable_mosaic.version = 11 : i64} {
  func.func @kernel(%arg0: i32, %arg1: i32, %arg2: memref<1x64x3xf32, #tpu.memory_space<vmem>>, %arg3: memref<3x64xf32, #tpu.memory_space<vmem>>, %arg4: memref<1x64xf32, #tpu.memory_space<vmem>>, %arg5: memref<64x128xf32, #tpu.memory_space<vmem>>, %arg6: memref<1x128xf32, #tpu.memory_space<vmem>>, %arg7: memref<128x1024xf32, #tpu.memory_space<vmem>>, %arg8: memref<1x1024xf32, #tpu.memory_space<vmem>>, %arg9: memref<1x1x1024xf32, #tpu.memory_space<vmem>>) attributes {dimension_semantics = [#tpu.dimension_semantics<parallel>, #tpu.dimension_semantics<arbitrary>], iteration_bounds = array<i64: 2, 4>, scalar_prefetch = 0 : i64, scratch_operands = 0 : i64, tpu.core_type = #tpu.core_type<tc>, window_params = [{transform_indices = @transform_0, window_bounds = array<i64: 1, 64, 3>}, {pipeline_mode = #tpu.pipeline_mode<synchronous>, transform_indices = @transform_1, window_bounds = array<i64: 3, 64>}, {pipeline_mode = #tpu.pipeline_mode<synchronous>, transform_indices = @transform_2, window_bounds = array<i64: 1, 64>}, {pipeline_mode = #tpu.pipeline_mode<synchronous>, transform_indices = @transform_3, window_bounds = array<i64: 64, 128>}, {pipeline_mode = #tpu.pipeline_mode<synchronous>, transform_indices = @transform_4, window_bounds = array<i64: 1, 128>}, {pipeline_mode = #tpu.pipeline_mode<synchronous>, transform_indices = @transform_5, window_bounds = array<i64: 128, 1024>}, {pipeline_mode = #tpu.pipeline_mode<synchronous>, transform_indices = @transform_6, window_bounds = array<i64: 1, 1024>}, {transform_indices = @transform_7, window_bounds = array<i64: 1, 1, 1024>}]} {
    %c0 = arith.constant 0 : index
    %c0_0 = arith.constant 0 : index
    %c0_1 = arith.constant 0 : index
    %0 = vector.load %arg2[%c0, %c0_0, %c0_1] : memref<1x64x3xf32, #tpu.memory_space<vmem>>, vector<1x64x3xf32>
    %1 = vector.shape_cast %0 : vector<1x64x3xf32> to vector<64x3xf32>
    %c0_2 = arith.constant 0 : index
    %c0_3 = arith.constant 0 : index
    %2 = vector.load %arg3[%c0_2, %c0_3] : memref<3x64xf32, #tpu.memory_space<vmem>>, vector<3x64xf32>
    %cst = arith.constant dense<0.000000e+00> : vector<64x64xf32>
    %3 = tpu.matmul %1, %2, %cst {dimension_numbers = #tpu.dot_dimension_numbers<[1], [0], [0], [1], [0, 0, 1, 1], [], []>} : vector<64x3xf32>, vector<3x64xf32>, vector<64x64xf32> -> vector<64x64xf32>
    %c0_4 = arith.constant 0 : index
    %c0_5 = arith.constant 0 : index
    %4 = vector.load %arg4[%c0_4, %c0_5] : memref<1x64xf32, #tpu.memory_space<vmem>>, vector<1x64xf32>
    %5 = vector.broadcast %4 : vector<1x64xf32> to vector<64x64xf32>
    %6 = arith.addf %3, %5 : vector<64x64xf32>
    %cst_6 = arith.constant 0.000000e+00 : f32
    %7 = vector.broadcast %cst_6 : f32 to vector<64x64xf32>
    %8 = arith.maximumf %6, %7 : vector<64x64xf32>
    %c0_7 = arith.constant 0 : index
    %c0_8 = arith.constant 0 : index
    %9 = vector.load %arg5[%c0_7, %c0_8] : memref<64x128xf32, #tpu.memory_space<vmem>>, vector<64x128xf32>
    %cst_9 = arith.constant dense<0.000000e+00> : vector<64x128xf32>
    %10 = tpu.matmul %8, %9, %cst_9 {dimension_numbers = #tpu.dot_dimension_numbers<[1], [0], [0], [1], [0, 0, 1, 1], [], []>} : vector<64x64xf32>, vector<64x128xf32>, vector<64x128xf32> -> vector<64x128xf32>
    %c0_10 = arith.constant 0 : index
    %c0_11 = arith.constant 0 : index
    %11 = vector.load %arg6[%c0_10, %c0_11] : memref<1x128xf32, #tpu.memory_space<vmem>>, vector<1x128xf32>
    %12 = vector.broadcast %11 : vector<1x128xf32> to vector<64x128xf32>
    %13 = arith.addf %10, %12 : vector<64x128xf32>
    %cst_12 = arith.constant 0.000000e+00 : f32
    %14 = vector.broadcast %cst_12 : f32 to vector<64x128xf32>
    %15 = arith.maximumf %13, %14 : vector<64x128xf32>
    %c0_13 = arith.constant 0 : index
    %c0_14 = arith.constant 0 : index
    %16 = vector.load %arg7[%c0_13, %c0_14] : memref<128x1024xf32, #tpu.memory_space<vmem>>, vector<128x1024xf32>
    %cst_15 = arith.constant dense<0.000000e+00> : vector<64x1024xf32>
    %17 = tpu.matmul %15, %16, %cst_15 {dimension_numbers = #tpu.dot_dimension_numbers<[1], [0], [0], [1], [0, 0, 1, 1], [], []>} : vector<64x128xf32>, vector<128x1024xf32>, vector<64x1024xf32> -> vector<64x1024xf32>
    %c0_16 = arith.constant 0 : index
    %c0_17 = arith.constant 0 : index
    %18 = vector.load %arg8[%c0_16, %c0_17] : memref<1x1024xf32, #tpu.memory_space<vmem>>, vector<1x1024xf32>
    %19 = vector.broadcast %18 : vector<1x1024xf32> to vector<64x1024xf32>
    %20 = arith.addf %17, %19 : vector<64x1024xf32>
    %cst_18 = arith.constant 0.000000e+00 : f32
    %21 = vector.broadcast %cst_18 : f32 to vector<64x1024xf32>
    %22 = arith.maximumf %20, %21 : vector<64x1024xf32>
    %cst_19 = arith.constant dense<0xFF800000> : vector<1024xf32>
    %23 = vector.multi_reduction <maximumf>, %22, %cst_19 [0] : vector<64x1024xf32> to vector<1024xf32>
    %24 = vector.shape_cast %23 : vector<1024xf32> to vector<1x1024xf32>
    %c0_i32 = arith.constant 0 : i32
    %25 = arith.cmpi eq, %arg1, %c0_i32 : i32
    %26 = arith.extui %25 : i1 to i32
    %c0_i32_20 = arith.constant 0 : i32
    %27 = arith.cmpi ne, %26, %c0_i32_20 : i32
    scf.if %27 {
      %c0_23 = arith.constant 0 : index
      %c0_24 = arith.constant 0 : index
      %c0_25 = arith.constant 0 : index
      %31 = vector.load %arg9[%c0_23, %c0_24, %c0_25] : memref<1x1x1024xf32, #tpu.memory_space<vmem>>, vector<1x1x1024xf32>
      %32 = vector.shape_cast %31 : vector<1x1x1024xf32> to vector<1x1024xf32>
      %33 = vector.shape_cast %24 : vector<1x1024xf32> to vector<1x1x1024xf32>
      tpu.vector_store %arg9[%c0_23, %c0_24, %c0_25], %33 {strides = array<i32>} : memref<1x1x1024xf32, #tpu.memory_space<vmem>>, vector<1x1x1024xf32>,
    } else {
    }
    %c0_i32_21 = arith.constant 0 : i32
    %28 = arith.cmpi sgt, %arg1, %c0_i32_21 : i32
    %29 = arith.extui %28 : i1 to i32
    %c0_i32_22 = arith.constant 0 : i32
    %30 = arith.cmpi ne, %29, %c0_i32_22 : i32
    scf.if %30 {
      %c0_23 = arith.constant 0 : index
      %c0_24 = arith.constant 0 : index
      %c0_25 = arith.constant 0 : index
      %31 = vector.load %arg9[%c0_23, %c0_24, %c0_25] : memref<1x1x1024xf32, #tpu.memory_space<vmem>>, vector<1x1x1024xf32>
      %32 = vector.shape_cast %31 : vector<1x1x1024xf32> to vector<1x1024xf32>
      %33 = arith.maximumf %32, %24 : vector<1x1024xf32>
      %c0_26 = arith.constant 0 : index
      %c0_27 = arith.constant 0 : index
      %c0_28 = arith.constant 0 : index
      %34 = vector.load %arg9[%c0_26, %c0_27, %c0_28] : memref<1x1x1024xf32, #tpu.memory_space<vmem>>, vector<1x1x1024xf32>
      %35 = vector.shape_cast %34 : vector<1x1x1024xf32> to vector<1x1024xf32>
      %36 = vector.shape_cast %33 : vector<1x1024xf32> to vector<1x1x1024xf32>
      tpu.vector_store %arg9[%c0_26, %c0_27, %c0_28], %36 {strides = array<i32>} : memref<1x1x1024xf32, #tpu.memory_space<vmem>>, vector<1x1x1024xf32>,
    } else {
    }
    return
  }
  func.func @transform_0(%arg0: i32, %arg1: i32) -> (i32, i32, i32) {
    %c0_i32 = arith.constant 0 : i32
    %c0_i32_0 = arith.constant 0 : i32
    return %arg0, %arg1, %c0_i32 : i32, i32, i32
  }
  func.func @transform_1(%arg0: i32, %arg1: i32) -> (i32, i32) {
    %c0_i32 = arith.constant 0 : i32
    %c0_i32_0 = arith.constant 0 : i32
    %c0_i32_1 = arith.constant 0 : i32
    return %c0_i32, %c0_i32_0 : i32, i32
  }
  func.func @transform_2(%arg0: i32, %arg1: i32) -> (i32, i32) {
    %c0_i32 = arith.constant 0 : i32
    %c0_i32_0 = arith.constant 0 : i32
    %c0_i32_1 = arith.constant 0 : i32
    return %c0_i32, %c0_i32_0 : i32, i32
  }
  func.func @transform_3(%arg0: i32, %arg1: i32) -> (i32, i32) {
    %c0_i32 = arith.constant 0 : i32
    %c0_i32_0 = arith.constant 0 : i32
    %c0_i32_1 = arith.constant 0 : i32
    return %c0_i32, %c0_i32_0 : i32, i32
  }
  func.func @transform_4(%arg0: i32, %arg1: i32) -> (i32, i32) {
    %c0_i32 = arith.constant 0 : i32
    %c0_i32_0 = arith.constant 0 : i32
    %c0_i32_1 = arith.constant 0 : i32
    return %c0_i32, %c0_i32_0 : i32, i32
  }
  func.func @transform_5(%arg0: i32, %arg1: i32) -> (i32, i32) {
    %c0_i32 = arith.constant 0 : i32
    %c0_i32_0 = arith.constant 0 : i32
    %c0_i32_1 = arith.constant 0 : i32
    return %c0_i32, %c0_i32_0 : i32, i32
  }
  func.func @transform_6(%arg0: i32, %arg1: i32) -> (i32, i32) {
    %c0_i32 = arith.constant 0 : i32
    %c0_i32_0 = arith.constant 0 : i32
    %c0_i32_1 = arith.constant 0 : i32
    return %c0_i32, %c0_i32_0 : i32, i32
  }
  func.func @transform_7(%arg0: i32, %arg1: i32) -> (i32, i32, i32) {
    %c0_i32 = arith.constant 0 : i32
    %c0_i32_0 = arith.constant 0 : i32
    %c0_i32_1 = arith.constant 0 : i32
    return %arg0, %c0_i32, %c0_i32_0 : i32, i32, i32
  }
}

</mosaic_0001>

<llo_original>
// kernel: tpu_custom_call.1
$region0: #{tpu_custom_call.1}
  #allocation0 [shape = 'u32[]', space=smem, size = 0x4, offset = 0x4, fixed_abs, tag = 'smem constant byte address 0x4 - core index']
  #allocation1 [shape = 'u32[144,128]{1,0:T(1,128)}', space=vmem, size = 0x12000, scoped, tag = 'internal scratch']
  %s0 = inlined_call_operand.vmem [shape: f32[2,256,3], index: 0, kind: input, shape index: {}]
  %s1 = inlined_call_operand.vmem [shape: f32[3,64], index: 1, kind: input, shape index: {}]
  %s2 = inlined_call_operand.vmem [shape: f32[1,64], index: 2, kind: input, shape index: {}]
  %s3 = inlined_call_operand.vmem [shape: f32[64,128], index: 3, kind: input, shape index: {}]
  %s4 = inlined_call_operand.vmem [shape: f32[1,128], index: 4, kind: input, shape index: {}]
  %s5 = inlined_call_operand.hbm [shape: f32[128,1024], index: 5, kind: input, shape index: {}]
  %s6 = inlined_call_operand.vmem [shape: f32[1,1024], index: 6, kind: input, shape index: {}]
  %s7 = inlined_call_operand.hbm [shape: f32[2,1,1024], index: 7, kind: output, shape index: {}]
  %s8 = sld [smem:[#allocation0]]
  $region73: #{tpu_custom_call.1} parent=0
    _
  %s10 = ssub.s32 1, %s8
  %s11 = scalar_select 0, %s10, %s8
  $region1: #{tpu_custom_call.1} parent=0
    #allocation2 [shape = 'u8[524288]{0}', space=vmem, size = 0x80000, scoped, tag = 'input window, operand 5, single buffered']
    #allocation3 [shape = 's32[2]{0}', space=sflag, size = 0x8, scoped, tag = 'scoped memory for tpu_custom_call.1']
    #allocation4 [shape = 's32[2]{0}', space=sflag, size = 0x8, scoped, tag = 'scoped memory for tpu_custom_call.1']
    #allocation5 [shape = 'u8[8192]{0}', space=vmem, size = 0x2000, scoped, tag = 'output window, operand 0']
    %12 = vsyncpa [#allocation3], 0
    %13 = vsyncpa [#allocation4], 0
    %s14 = scalar_lea.sflag [#allocation4], 1
    %15 = vsyncpa %s14, 0
    loop: start=0, step=1, limit=10
    $region2: #{tpu_custom_call.1} parent=1 // loop_pre_header
      _
    $region3: #{tpu_custom_call.1} parent=1 // loop_header
      %s17 = sphi 0, %s21
      %p18 = scmp.ge.s32.totalorder %s17, 10
      %s24 = sphi 0, %s36
      %s25 = sphi 0, %s32
      %s26 = sphi 0, %s24
      %s27 = sphi 0, %s25
      %s28 = sphi 0, %s26
      %s29 = sphi 0, %s27
      %s41 = sphi 0, %s43
      %s44 = sphi 0, %s41
      %s45 = sphi 0, %s44
      %s61 = sphi 0, %s45
      %s65 = sphi 0, %s65
      %s67 = sphi 0, %s65
      %s68 = sphi 0, %s67
      %s82 = sphi 0, %s68
      %s86 = sphi 0, %s86
      %s88 = sphi 0, %s86
      %s89 = sphi 0, %s88
      %s103 = sphi 0, %s89
      %s107 = sphi 0, %s107
      %s109 = sphi 0, %s107
      %s110 = sphi 0, %s109
      %s124 = sphi 0, %s110
      %s128 = sphi 0, %s128
      %s130 = sphi 0, %s128
      %s131 = sphi 0, %s130
      %s145 = sphi 0, %s131
      %s149 = sphi 0, %s149
      %s151 = sphi 0, %s149
      %s152 = sphi 0, %s151
      %s166 = sphi 0, %s152
      %s170 = sphi 0, %s170
      %s172 = sphi 0, %s170
      %s173 = sphi 0, %s172
      %s187 = sphi 0, %s173
      %s193 = sphi 0, %s195
      %s196 = sphi 0, %s193
      %s197 = sphi 0, %s196
      %s213 = sphi 0, %s197
    $region4: #{tpu_custom_call.1} parent=1 // loop_header_branch
      %20 = sbr.rel (%p18) target = $region8
    $region5: #{tpu_custom_call.1} parent=1 // loop_body
      %s22 = ssub.s32 %s17, 1
      %s23 = ssub.s32 %s17, 2
      %s30 = sadd.s32 1, %s25
      %p31 = scmp.ge.s32.totalorder %s30, 4
      %s32 = scalar_select %p31, 0, %s30
      %s33 = sadd.s32 1, %s24
      %s34 = scalar_select %p31, %s33, %s24
      %p35 = scmp.ge.s32.totalorder %s34, 2
      %s36 = scalar_select %p35, 0, %s34
      %s37 = ssub.s32 %s24, %s36
      %s38 = ssub.s32 %s25, %s32
      %s39 = sor.u32 %s37, %s38
      %p40 = scmp.eq.s32.totalorder %s39, 0
      %s42 = sadd.s32 %s41, 1
      %s43 = scalar_select %p40, %s41, %s42
      %p46 = pneg %p40
      %p47 = scmp.eq.s32.totalorder %s17, 7
      %p48 = por %p46, %p47
      %p49 = scmp.ne.s32.totalorder %s41, %s44
      %p50 = scmp.eq.s32.totalorder %s17, 0
      %p51 = por %p49, %p50
      %p52 = scmp.ne.s32.totalorder %s41, %s44
      %p53 = scmp.eq.s32.totalorder %s22, 7
      %p54 = por %p52, %p53
      %p55 = scmp.ne.s32.totalorder %s44, %s45
      %p56 = scmp.eq.s32.totalorder %s22, 0
      %p57 = por %p55, %p56
      %p58 = scmp.ne.s32.totalorder %s44, %s45
      %p59 = scmp.eq.s32.totalorder %s23, 7
      %p60 = por %p58, %p59
      %p62 = scmp.ne.s32.totalorder %s45, %s61
      %p63 = scmp.eq.s32.totalorder %s23, 0
      %p64 = por %p62, %p63
      %s66 = sadd.s32 %s65, 1
      %p69 = scmp.eq.s32.totalorder %s17, 7
      %p70 = scmp.ne.s32.totalorder %s65, %s67
      %p71 = scmp.eq.s32.totalorder %s17, 0
      %p72 = por %p70, %p71
      %p73 = scmp.ne.s32.totalorder %s65, %s67
      %p74 = scmp.eq.s32.totalorder %s22, 7
      %p75 = por %p73, %p74
      %p76 = scmp.ne.s32.totalorder %s67, %s68
      %p77 = scmp.eq.s32.totalorder %s22, 0
      %p78 = por %p76, %p77
      %p79 = scmp.ne.s32.totalorder %s67, %s68
      %p80 = scmp.eq.s32.totalorder %s23, 7
      %p81 = por %p79, %p80
      %p83 = scmp.ne.s32.totalorder %s68, %s82
      %p84 = scmp.eq.s32.totalorder %s23, 0
      %p85 = por %p83, %p84
      %s87 = sadd.s32 %s86, 1
      %p90 = scmp.eq.s32.totalorder %s17, 7
      %p91 = scmp.ne.s32.totalorder %s86, %s88
      %p92 = scmp.eq.s32.totalorder %s17, 0
      %p93 = por %p91, %p92
      %p94 = scmp.ne.s32.totalorder %s86, %s88
      %p95 = scmp.eq.s32.totalorder %s22, 7
      %p96 = por %p94, %p95
      %p97 = scmp.ne.s32.totalorder %s88, %s89
      %p98 = scmp.eq.s32.totalorder %s22, 0
      %p99 = por %p97, %p98
      %p100 = scmp.ne.s32.totalorder %s88, %s89
      %p101 = scmp.eq.s32.totalorder %s23, 7
      %p102 = por %p100, %p101
      %p104 = scmp.ne.s32.totalorder %s89, %s103
      %p105 = scmp.eq.s32.totalorder %s23, 0
      %p106 = por %p104, %p105
      %s108 = sadd.s32 %s107, 1
      %p111 = scmp.eq.s32.totalorder %s17, 7
      %p112 = scmp.ne.s32.totalorder %s107, %s109
      %p113 = scmp.eq.s32.totalorder %s17, 0
      %p114 = por %p112, %p113
      %p115 = scmp.ne.s32.totalorder %s107, %s109
      %p116 = scmp.eq.s32.totalorder %s22, 7
      %p117 = por %p115, %p116
      %p118 = scmp.ne.s32.totalorder %s109, %s110
      %p119 = scmp.eq.s32.totalorder %s22, 0
      %p120 = por %p118, %p119
      %p121 = scmp.ne.s32.totalorder %s109, %s110
      %p122 = scmp.eq.s32.totalorder %s23, 7
      %p123 = por %p121, %p122
      %p125 = scmp.ne.s32.totalorder %s110, %s124
      %p126 = scmp.eq.s32.totalorder %s23, 0
      %p127 = por %p125, %p126
      %s129 = sadd.s32 %s128, 1
      %p132 = scmp.eq.s32.totalorder %s17, 7
      %p133 = scmp.ne.s32.totalorder %s128, %s130
      %p134 = scmp.eq.s32.totalorder %s17, 0
      %p135 = por %p133, %p134
      %p136 = scmp.ne.s32.totalorder %s128, %s130
      %p137 = scmp.eq.s32.totalorder %s22, 7
      %p138 = por %p136, %p137
      %p139 = scmp.ne.s32.totalorder %s130, %s131
      %p140 = scmp.eq.s32.totalorder %s22, 0
      %p141 = por %p139, %p140
      %p142 = scmp.ne.s32.totalorder %s130, %s131
      %p143 = scmp.eq.s32.totalorder %s23, 7
      %p144 = por %p142, %p143
      %p146 = scmp.ne.s32.totalorder %s131, %s145
      %p147 = scmp.eq.s32.totalorder %s23, 0
      %p148 = por %p146, %p147
      %s150 = sadd.s32 %s149, 1
      %p153 = scmp.eq.s32.totalorder %s17, 7
      %p154 = scmp.ne.s32.totalorder %s149, %s151
      %p155 = scmp.eq.s32.totalorder %s17, 0
      %p156 = por %p154, %p155
      %p157 = scmp.ne.s32.totalorder %s149, %s151
      %p158 = scmp.eq.s32.totalorder %s22, 7
      %p159 = por %p157, %p158
      %p160 = scmp.ne.s32.totalorder %s151, %s152
      %p161 = scmp.eq.s32.totalorder %s22, 0
      %p162 = por %p160, %p161
      %p163 = scmp.ne.s32.totalorder %s151, %s152
      %p164 = scmp.eq.s32.totalorder %s23, 7
      %p165 = por %p163, %p164
      %p167 = scmp.ne.s32.totalorder %s152, %s166
      %p168 = scmp.eq.s32.totalorder %s23, 0
      %p169 = por %p167, %p168
      %s171 = sadd.s32 %s170, 1
      %p174 = scmp.eq.s32.totalorder %s17, 7
      %p175 = scmp.ne.s32.totalorder %s170, %s172
      %p176 = scmp.eq.s32.totalorder %s17, 0
      %p177 = por %p175, %p176
      %p178 = scmp.ne.s32.totalorder %s170, %s172
      %p179 = scmp.eq.s32.totalorder %s22, 7
      %p180 = por %p178, %p179
      %p181 = scmp.ne.s32.totalorder %s172, %s173
      %p182 = scmp.eq.s32.totalorder %s22, 0
      %p183 = por %p181, %p182
      %p184 = scmp.ne.s32.totalorder %s172, %s173
      %p185 = scmp.eq.s32.totalorder %s23, 7
      %p186 = por %p184, %p185
      %p188 = scmp.ne.s32.totalorder %s173, %s187
      %p189 = scmp.eq.s32.totalorder %s23, 0
      %p190 = por %p188, %p189
      %s191 = ssub.s32 %s24, %s36
      %p192 = scmp.eq.s32.totalorder %s191, 0
      %s194 = sadd.s32 %s193, 1
      %s195 = scalar_select %p192, %s193, %s194
      %p198 = pneg %p192
      %p199 = scmp.eq.s32.totalorder %s17, 7
      %p200 = por %p198, %p199
      %p201 = scmp.ne.s32.totalorder %s193, %s196
      %p202 = scmp.eq.s32.totalorder %s17, 0
      %p203 = por %p201, %p202
      %p204 = scmp.ne.s32.totalorder %s193, %s196
      %p205 = scmp.eq.s32.totalorder %s22, 7
      %p206 = por %p204, %p205
      %p207 = scmp.ne.s32.totalorder %s196, %s197
      %p208 = scmp.eq.s32.totalorder %s22, 0
      %p209 = por %p207, %p208
      %p210 = scmp.ne.s32.totalorder %s196, %s197
      %p211 = scmp.eq.s32.totalorder %s23, 7
      %p212 = por %p210, %p211
      %p214 = scmp.ne.s32.totalorder %s197, %s213
      %p215 = scmp.eq.s32.totalorder %s23, 0
      %p216 = por %p214, %p215
      %p217 = scmp.le.s32.totalorder 1, %s17
      %p218 = scmp.lt.s32.totalorder %s17, 9
      %p219 = pnand %p217, %p218
      %p220 = pneg %p219
      // Predicated region
      $region9: #{tpu_custom_call.1} parent=5 // pred_check
        _
      $region10: #{tpu_custom_call.1} parent=5 // pred_check_branch
        %222 = sbr.rel (%p219) target = $region12
      $region11: #{tpu_custom_call.1} parent=5 // pred_region
        %s223 = ssub.s32 %s17, 1
        // Predicated region
        $region13: #{tpu_custom_call.1} parent=11 // pred_check
          %p224 = pneg %p78
        $region14: #{tpu_custom_call.1} parent=11 // pred_check_branch
          %226 = sbr.rel (%p224) target = $region16
        $region15: #{tpu_custom_call.1} parent=11 // pred_region
          _
        $region16: #{tpu_custom_call.1} parent=11 // pred_fallthru
          _
        // Predicated region
        $region17: #{tpu_custom_call.1} parent=11 // pred_check
          %p227 = pneg %p99
        $region18: #{tpu_custom_call.1} parent=11 // pred_check_branch
          %229 = sbr.rel (%p227) target = $region20
        $region19: #{tpu_custom_call.1} parent=11 // pred_region
          _
        $region20: #{tpu_custom_call.1} parent=11 // pred_fallthru
          _
        // Predicated region
        $region21: #{tpu_custom_call.1} parent=11 // pred_check
          %p230 = pneg %p120
        $region22: #{tpu_custom_call.1} parent=11 // pred_check_branch
          %232 = sbr.rel (%p230) target = $region24
        $region23: #{tpu_custom_call.1} parent=11 // pred_region
          _
        $region24: #{tpu_custom_call.1} parent=11 // pred_fallthru
          _
        // Predicated region
        $region25: #{tpu_custom_call.1} parent=11 // pred_check
          %p233 = pneg %p141
        $region26: #{tpu_custom_call.1} parent=11 // pred_check_branch
          %235 = sbr.rel (%p233) target = $region28
        $region27: #{tpu_custom_call.1} parent=11 // pred_region
          _
        $region28: #{tpu_custom_call.1} parent=11 // pred_fallthru
          _
        // Predicated region
        $region29: #{tpu_custom_call.1} parent=11 // pred_check
          %p236 = pneg %p162
        $region30: #{tpu_custom_call.1} parent=11 // pred_check_branch
          %238 = sbr.rel (%p236) target = $region32
        $region31: #{tpu_custom_call.1} parent=11 // pred_region
          %s240 = ssub.s32 16384, 16384
          %241 = vsyncadd [#allocation3], %s240
          %s242 = sshll.u32 [#allocation2], 4
          %s243 = int_to_ptr.vmem [resolvable:$true] %s242
          %248 = dma.hbm_to_vmem [thread:$0]  %s5, 16384, %s243, [#allocation3], 1024, 1024, 64
        $region32: #{tpu_custom_call.1} parent=11 // pred_fallthru
          _
        // Predicated region
        $region33: #{tpu_custom_call.1} parent=11 // pred_check
          %p249 = pneg %p183
        $region34: #{tpu_custom_call.1} parent=11 // pred_check_branch
          %251 = sbr.rel (%p249) target = $region36
        $region35: #{tpu_custom_call.1} parent=11 // pred_region
          _
        $region36: #{tpu_custom_call.1} parent=11 // pred_fallthru
          _
      $region12: #{tpu_custom_call.1} parent=5 // pred_fallthru
        _
      %p252 = scmp.lt.s32.totalorder %s17, 8
      // Predicated region
      $region37: #{tpu_custom_call.1} parent=5 // pred_check
        %p253 = pneg %p252
      $region38: #{tpu_custom_call.1} parent=5 // pred_check_branch
        %255 = sbr.rel (%p253) target = $region40
      $region39: #{tpu_custom_call.1} parent=5 // pred_region
        // Predicated region
        $region41: #{tpu_custom_call.1} parent=39 // pred_check
          %p256 = pneg %p51
        $region42: #{tpu_custom_call.1} parent=39 // pred_check_branch
          %258 = sbr.rel (%p256) target = $region44
        $region43: #{tpu_custom_call.1} parent=39 // pred_region
          %s259 = smul.u32 8, %s25
          %p260 = scmp.lt.s32.totalorder %s24, 1
          %s261 = scalar_select %p260, %s24, 1
          %p262 = scmp.lt.s32.totalorder %s259, 31
          %s263 = scalar_select %p262, %s259, 31
          %s264 = smul.addr %s261, 32
          %s265 = sadd.s32 %s263, %s264
          %s266 = smul.addr %s265, 8
          %s267 = scalar_lea.vmem %s0, %s266
          %s268 = smul.u32 8, %s25
        $region44: #{tpu_custom_call.1} parent=39 // pred_fallthru
          _
      $region40: #{tpu_custom_call.1} parent=5 // pred_fallthru
        _
      %p269 = scmp.le.s32.totalorder 1, %s17
      %p270 = scmp.lt.s32.totalorder %s17, 9
      %p271 = pnand %p269, %p270
      %p272 = pneg %p271
      // Predicated region
      $region45: #{tpu_custom_call.1} parent=5 // pred_check
        _
      $region46: #{tpu_custom_call.1} parent=5 // pred_check_branch
        %274 = sbr.rel (%p271) target = $region48
      $region47: #{tpu_custom_call.1} parent=5 // pred_region
        %s275 = ssub.s32 %s17, 1
        // Predicated region
        $region49: #{tpu_custom_call.1} parent=47 // pred_check
          %p276 = pneg %p162
        $region50: #{tpu_custom_call.1} parent=47 // pred_check_branch
          %278 = sbr.rel (%p276) target = $region52
        $region51: #{tpu_custom_call.1} parent=47 // pred_region
          %279 = dma.done [#allocation3], 16384
        $region52: #{tpu_custom_call.1} parent=47 // pred_fallthru
          _
        %s280 = smul.u32 8, %s27
        %p281 = scmp.lt.s32.totalorder %s26, 1
        %s282 = scalar_select %p281, %s26, 1
        %p283 = scmp.lt.s32.totalorder %s280, 31
        %s284 = scalar_select %p283, %s280, 31
        %s285 = smul.addr %s282, 32
        %s286 = sadd.s32 %s284, %s285
        %s287 = smul.addr %s286, 8
        %s288 = scalar_lea.vmem %s0, %s287
        %p289 = pneg %p57
        %p290 = pneg %p54
        %p291 = pneg %p78
        %p292 = pneg %p75
        %p293 = pneg %p99
        %p294 = pneg %p96
        %p295 = pneg %p120
        %p296 = pneg %p117
        %p297 = pneg %p141
        %p298 = pneg %p138
        %p299 = pneg %p162
        %p300 = pneg %p159
        %p301 = pneg %p183
        %p302 = pneg %p180
        %p303 = pneg %p209
        %p304 = pneg %p206
        %s305 = sand.u32 %s196, 1
        %s306 = scalar_lea.sflag [#allocation4], %s305
        %s307 = sand.u32 %s196, 1
        %s308 = smul.addr %s307, 8
        %s309 = scalar_lea.vmem [#allocation5], %s308
        %s310 = smul.u32 8, %s27
        %p311 = scmp.lt.s32.totalorder %s26, 1
        %s312 = scalar_select %p311, %s26, 1
        %p313 = scmp.lt.s32.totalorder %s310, 31
        %s314 = scalar_select %p313, %s310, 31
        %s315 = smul.addr %s312, 32
        %s316 = sadd.s32 %s314, %s315
        %s317 = smul.addr %s316, 8
        %s318 = scalar_lea.vmem %s0, %s317
        %s319 = smul.u32 8, %s27
        %v320 = vld [vmem:[%s318] sm:$0xff]
        %v321 = vld [vmem:[%s318 + $0x8] sm:$0xff]
        %v322 = vld [vmem:[%s318 + $0x10] sm:$0xff]
        %v323 = vld [vmem:[%s318 + $0x18] sm:$0xff]
        %v324 = vld [vmem:[%s318 + $0x20] sm:$0xff]
        %v325 = vld [vmem:[%s318 + $0x28] sm:$0xff]
        %v326 = vld [vmem:[%s318 + $0x30] sm:$0xff]
        %v327 = vld [vmem:[%s318 + $0x38] sm:$0xff]
        %v328 = vld [vmem:[%s1] sm:$0x7]
        %v329 = vld [vmem:[%s2] sm:$0x1]
        %v331 = vlaneseq
        %v332 = vshrl.u32 %v331, 7
        %v333 = vsub.s32 0, %v332
        %v334 = vrot.slane %v329, %v333
        %vm336 = vcmask 23552
        %v338 = vsel %vm336, %v320, 0
        %v341 = vsel %vm336, %v321, 0
        %v344 = vsel %vm336, %v322, 0
        %v347 = vsel %vm336, %v323, 0
        %v350 = vsel %vm336, %v324, 0
        %v353 = vsel %vm336, %v325, 0
        %v356 = vsel %vm336, %v326, 0
        %v359 = vsel %vm336, %v327, 0
        %vm361 = vcmask 1042432
        %v363 = vsel %vm361, %v328, 0
        %365 = vmatprep.subr.mxu0 0.0
        %366 = vmatpush1.msra.mxu0 %v363
        %367 = vmatprep.subr.mxu0 0.0
        %368 = vmatpush1.msra.mxu0 0.0
        %369 = vmatprep.subr.mxu0 0.0
        %370 = vmatpush1.msra.mxu0 0.0
        %371 = vmatprep.subr.mxu0 0.0
        %372 = vmatpush1.msra.mxu0 0.0
        %373 = vmatprep.subr.mxu0 0.0
        %374 = vmatpush1.msra.mxu0 0.0
        %375 = vmatprep.subr.mxu0 0.0
        %376 = vmatpush1.msra.mxu0 0.0
        %377 = vmatprep.subr.mxu0 0.0
        %378 = vmatpush1.msra.mxu0 0.0
        %379 = vmatprep.subr.mxu0 0.0
        %380 = vmatpush1.msra.mxu0 0.0
        %381 = vmatprep.subr.mxu0 0.0
        %382 = vmatpush1.msra.mxu0 0.0
        %383 = vmatprep.subr.mxu0 0.0
        %384 = vmatpush1.msra.mxu0 0.0
        %385 = vmatprep.subr.mxu0 0.0
        %386 = vmatpush1.msra.mxu0 0.0
        %387 = vmatprep.subr.mxu0 0.0
        %388 = vmatpush1.msra.mxu0 0.0
        %389 = vmatprep.subr.mxu0 0.0
        %390 = vmatpush1.msra.mxu0 0.0
        %391 = vmatprep.subr.mxu0 0.0
        %392 = vmatpush1.msra.mxu0 0.0
        %393 = vmatprep.subr.mxu0 0.0
        %394 = vmatpush1.msra.mxu0 0.0
        %395 = vmatprep.subr.mxu0 0.0
        %396 = vmatpush1.msra.mxu0 0.0
        %397 = vmatprep.subr.mxu0 0.0
        %398 = vmatpush1.msra.mxu0 0.0
        %399 = vmatprep.subr.mxu0 0.0
        %400 = vmatpush1.msra.mxu0 0.0
        %401 = vmatprep.subr.mxu0 0.0
        %402 = vmatpush1.msra.mxu0 0.0
        %403 = vmatprep.subr.mxu0 0.0
        %404 = vmatpush1.msra.mxu0 0.0
        %405 = vmatprep.subr.mxu0 0.0
        %406 = vmatpush1.msra.mxu0 0.0
        %407 = vmatprep.subr.mxu0 0.0
        %408 = vmatpush1.msra.mxu0 0.0
        %409 = vmatprep.subr.mxu0 0.0
        %410 = vmatpush1.msra.mxu0 0.0
        %411 = vmatprep.subr.mxu0 0.0
        %412 = vmatpush1.msra.mxu0 0.0
        %413 = vmatprep.subr.mxu0 0.0
        %414 = vmatpush1.msra.mxu0 0.0
        %415 = vmatprep.subr.mxu0 0.0
        %416 = vmatpush1.msra.mxu0 0.0
        %417 = vmatprep.subr.mxu0 0.0
        %418 = vmatpush1.msra.mxu0 0.0
        %419 = vmatprep.subr.mxu0 0.0
        %420 = vmatpush1.msra.mxu0 0.0
        %421 = vmatprep.subr.mxu0 0.0
        %422 = vmatpush1.msra.mxu0 0.0
        %423 = vmatprep.subr.mxu0 0.0
        %424 = vmatpush1.msra.mxu0 0.0
        %425 = vmatprep.subr.mxu0 0.0
        %426 = vmatpush1.msra.mxu0 0.0
        %427 = vmatprep.subr.mxu0 0.0
        %428 = vmatpush1.msra.mxu0 0.0
        %429 = vmatprep.mubr.f32.mxu0 0.0
        %430 = vmatmul.mubr.f32.gmra.mrb[0].mxu0 %v338
        %v431 = vpop.f32.mrb[0].mxu0
        %v432 = vadd.f32 %v334, %v431
        %v433 = vpop.f32.mrb[0].mxu0
        %434 = vmatprep.mubr.f32.mxu0 0.0
        %435 = vmatmul.mubr.f32.gmra.mrb[0].mxu0 %v341
        %v436 = vpop.f32.mrb[0].mxu0
        %v437 = vadd.f32 %v334, %v436
        %v438 = vpop.f32.mrb[0].mxu0
        %439 = vmatprep.mubr.f32.mxu0 0.0
        %440 = vmatmul.mubr.f32.gmra.mrb[0].mxu0 %v344
        %v441 = vpop.f32.mrb[0].mxu0
        %v442 = vadd.f32 %v334, %v441
        %v443 = vpop.f32.mrb[0].mxu0
        %444 = vmatprep.mubr.f32.mxu0 0.0
        %445 = vmatmul.mubr.f32.gmra.mrb[0].mxu0 %v347
        %v446 = vpop.f32.mrb[0].mxu0
        %v447 = vadd.f32 %v334, %v446
        %v448 = vpop.f32.mrb[0].mxu0
        %449 = vmatprep.mubr.f32.mxu0 0.0
        %450 = vmatmul.mubr.f32.gmra.mrb[0].mxu0 %v350
        %v451 = vpop.f32.mrb[0].mxu0
        %v452 = vadd.f32 %v334, %v451
        %v453 = vpop.f32.mrb[0].mxu0
        %454 = vmatprep.mubr.f32.mxu0 0.0
        %455 = vmatmul.mubr.f32.gmra.mrb[0].mxu0 %v353
        %v456 = vpop.f32.mrb[0].mxu0
        %v457 = vadd.f32 %v334, %v456
        %v458 = vpop.f32.mrb[0].mxu0
        %459 = vmatprep.mubr.f32.mxu0 0.0
        %460 = vmatmul.mubr.f32.gmra.mrb[0].mxu0 %v356
        %v461 = vpop.f32.mrb[0].mxu0
        %v462 = vadd.f32 %v334, %v461
        %v463 = vpop.f32.mrb[0].mxu0
        %464 = vmatprep.mubr.f32.mxu0 0.0
        %465 = vmatmul.mubr.f32.gmra.mrb[0].mxu0 %v359
        %v466 = vpop.f32.mrb[0].mxu0
        %v467 = vadd.f32 %v334, %v466
        %v468 = vpop.f32.mrb[0].mxu0
        %469 = vdwg.mxu0
        %v470 = vmax.f32 %v432, 0.0
        %v471 = vmax.f32 %v437, 0.0
        %v472 = vmax.f32 %v442, 0.0
        %v473 = vmax.f32 %v447, 0.0
        %v474 = vmax.f32 %v452, 0.0
        %v475 = vmax.f32 %v457, 0.0
        %v476 = vmax.f32 %v462, 0.0
        %v477 = vmax.f32 %v467, 0.0
        %v478 = vld [vmem:[%s3] sm:$0xff]
        %v479 = vld [vmem:[%s3 + $0x8] sm:$0xff]
        %v480 = vld [vmem:[%s3 + $0x10] sm:$0xff]
        %v481 = vld [vmem:[%s3 + $0x18] sm:$0xff]
        %v482 = vld [vmem:[%s3 + $0x20] sm:$0xff]
        %v483 = vld [vmem:[%s3 + $0x28] sm:$0xff]
        %v484 = vld [vmem:[%s3 + $0x30] sm:$0xff]
        %v485 = vld [vmem:[%s3 + $0x38] sm:$0xff]
        %v486 = vld [vmem:[%s4] sm:$0x1]
        %v488 = vlaneseq
        %v489 = vshrl.u32 %v488, 7
        %v490 = vsub.s32 0, %v489
        %v491 = vrot.slane %v486, %v490
        %vm493 = vcmask 523264
        %v495 = vsel %vm493, %v470, 0
        %v498 = vsel %vm493, %v471, 0
        %v501 = vsel %vm493, %v472, 0
        %v504 = vsel %vm493, %v473, 0
        %v507 = vsel %vm493, %v474, 0
        %v510 = vsel %vm493, %v475, 0
        %v513 = vsel %vm493, %v476, 0
        %v516 = vsel %vm493, %v477, 0
        %518 = vmatprep.subr.mxu0 0.0
        %519 = vmatpush1.msra.mxu0 %v478
        %520 = vmatprep.subr.mxu0 0.0
        %521 = vmatpush1.msra.mxu0 %v479
        %522 = vmatprep.subr.mxu0 0.0
        %523 = vmatpush1.msra.mxu0 %v480
        %524 = vmatprep.subr.mxu0 0.0
        %525 = vmatpush1.msra.mxu0 %v481
        %526 = vmatprep.subr.mxu0 0.0
        %527 = vmatpush1.msra.mxu0 %v482
        %528 = vmatprep.subr.mxu0 0.0
        %529 = vmatpush1.msra.mxu0 %v483
        %530 = vmatprep.subr.mxu0 0.0
        %531 = vmatpush1.msra.mxu0 %v484
        %532 = vmatprep.subr.mxu0 0.0
        %533 = vmatpush1.msra.mxu0 %v485
        %534 = vmatprep.subr.mxu0 0.0
        %535 = vmatpush1.msra.mxu0 0.0
        %536 = vmatprep.subr.mxu0 0.0
        %537 = vmatpush1.msra.mxu0 0.0
        %538 = vmatprep.subr.mxu0 0.0
        %539 = vmatpush1.msra.mxu0 0.0
        %540 = vmatprep.subr.mxu0 0.0
        %541 = vmatpush1.msra.mxu0 0.0
        %542 = vmatprep.subr.mxu0 0.0
        %543 = vmatpush1.msra.mxu0 0.0
        %544 = vmatprep.subr.mxu0 0.0
        %545 = vmatpush1.msra.mxu0 0.0
        %546 = vmatprep.subr.mxu0 0.0
        %547 = vmatpush1.msra.mxu0 0.0
        %548 = vmatprep.subr.mxu0 0.0
        %549 = vmatpush1.msra.mxu0 0.0
        %550 = vmatprep.subr.mxu0 0.0
        %551 = vmatpush1.msra.mxu0 0.0
        %552 = vmatprep.subr.mxu0 0.0
        %553 = vmatpush1.msra.mxu0 0.0
        %554 = vmatprep.subr.mxu0 0.0
        %555 = vmatpush1.msra.mxu0 0.0
        %556 = vmatprep.subr.mxu0 0.0
        %557 = vmatpush1.msra.mxu0 0.0
        %558 = vmatprep.subr.mxu0 0.0
        %559 = vmatpush1.msra.mxu0 0.0
        %560 = vmatprep.subr.mxu0 0.0
        %561 = vmatpush1.msra.mxu0 0.0
        %562 = vmatprep.subr.mxu0 0.0
        %563 = vmatpush1.msra.mxu0 0.0
        %564 = vmatprep.subr.mxu0 0.0
        %565 = vmatpush1.msra.mxu0 0.0
        %566 = vmatprep.subr.mxu0 0.0
        %567 = vmatpush1.msra.mxu0 0.0
        %568 = vmatprep.subr.mxu0 0.0
        %569 = vmatpush1.msra.mxu0 0.0
        %570 = vmatprep.subr.mxu0 0.0
        %571 = vmatpush1.msra.mxu0 0.0
        %572 = vmatprep.subr.mxu0 0.0
        %573 = vmatpush1.msra.mxu0 0.0
        %574 = vmatprep.subr.mxu0 0.0
        %575 = vmatpush1.msra.mxu0 0.0
        %576 = vmatprep.subr.mxu0 0.0
        %577 = vmatpush1.msra.mxu0 0.0
        %578 = vmatprep.subr.mxu0 0.0
        %579 = vmatpush1.msra.mxu0 0.0
        %580 = vmatprep.subr.mxu0 0.0
        %581 = vmatpush1.msra.mxu0 0.0
        %582 = vmatprep.mubr.f32.mxu0 0.0
        %583 = vmatmul.mubr.f32.gmra.mrb[0].mxu0 %v495
        %v584 = vpop.f32.mrb[0].mxu0
        %v585 = vadd.f32 %v491, %v584
        %v586 = vpop.f32.mrb[0].mxu0
        %587 = vmatprep.mubr.f32.mxu0 0.0
        %588 = vmatmul.mubr.f32.gmra.mrb[0].mxu0 %v498
        %v589 = vpop.f32.mrb[0].mxu0
        %v590 = vadd.f32 %v491, %v589
        %v591 = vpop.f32.mrb[0].mxu0
        %592 = vmatprep.mubr.f32.mxu0 0.0
        %593 = vmatmul.mubr.f32.gmra.mrb[0].mxu0 %v501
        %v594 = vpop.f32.mrb[0].mxu0
        %v595 = vadd.f32 %v491, %v594
        %v596 = vpop.f32.mrb[0].mxu0
        %597 = vmatprep.mubr.f32.mxu0 0.0
        %598 = vmatmul.mubr.f32.gmra.mrb[0].mxu0 %v504
        %v599 = vpop.f32.mrb[0].mxu0
        %v600 = vadd.f32 %v491, %v599
        %v601 = vpop.f32.mrb[0].mxu0
        %602 = vmatprep.mubr.f32.mxu0 0.0
        %603 = vmatmul.mubr.f32.gmra.mrb[0].mxu0 %v507
        %v604 = vpop.f32.mrb[0].mxu0
        %v605 = vadd.f32 %v491, %v604
        %v606 = vpop.f32.mrb[0].mxu0
        %607 = vmatprep.mubr.f32.mxu0 0.0
        %608 = vmatmul.mubr.f32.gmra.mrb[0].mxu0 %v510
        %v609 = vpop.f32.mrb[0].mxu0
        %v610 = vadd.f32 %v491, %v609
        %v611 = vpop.f32.mrb[0].mxu0
        %612 = vmatprep.mubr.f32.mxu0 0.0
        %613 = vmatmul.mubr.f32.gmra.mrb[0].mxu0 %v513
        %v614 = vpop.f32.mrb[0].mxu0
        %v615 = vadd.f32 %v491, %v614
        %v616 = vpop.f32.mrb[0].mxu0
        %617 = vmatprep.mubr.f32.mxu0 0.0
        %618 = vmatmul.mubr.f32.gmra.mrb[0].mxu0 %v516
        %v619 = vpop.f32.mrb[0].mxu0
        %v620 = vadd.f32 %v491, %v619
        %v621 = vpop.f32.mrb[0].mxu0
        %622 = vdwg.mxu0
        %v623 = vmax.f32 %v585, 0.0
        %v624 = vmax.f32 %v590, 0.0
        %v625 = vmax.f32 %v595, 0.0
        %v626 = vmax.f32 %v600, 0.0
        %v627 = vmax.f32 %v605, 0.0
        %v628 = vmax.f32 %v610, 0.0
        %v629 = vmax.f32 %v615, 0.0
        %v630 = vmax.f32 %v620, 0.0
        %v631 = vld [vmem:[#allocation2] sm:$0xff]
        %v632 = vld [vmem:[#allocation2 + $0x8] sm:$0xff]
        %v633 = vld [vmem:[#allocation2 + $0x10] sm:$0xff]
        %v634 = vld [vmem:[#allocation2 + $0x18] sm:$0xff]
        %v635 = vld [vmem:[#allocation2 + $0x20] sm:$0xff]
        %v636 = vld [vmem:[#allocation2 + $0x28] sm:$0xff]
        %v637 = vld [vmem:[#allocation2 + $0x30] sm:$0xff]
        %v638 = vld [vmem:[#allocation2 + $0x38] sm:$0xff]
        %v639 = vld [vmem:[#allocation2 + $0x40] sm:$0xff]
        %v640 = vld [vmem:[#allocation2 + $0x48] sm:$0xff]
        %v641 = vld [vmem:[#allocation2 + $0x50] sm:$0xff]
        %v642 = vld [vmem:[#allocation2 + $0x58] sm:$0xff]
        %v643 = vld [vmem:[#allocation2 + $0x60] sm:$0xff]
        %v644 = vld [vmem:[#allocation2 + $0x68] sm:$0xff]
        %v645 = vld [vmem:[#allocation2 + $0x70] sm:$0xff]
        %v646 = vld [vmem:[#allocation2 + $0x78] sm:$0xff]
        %v647 = vld [vmem:[#allocation2 + $0x80] sm:$0xff]
        %v648 = vld [vmem:[#allocation2 + $0x88] sm:$0xff]
        %v649 = vld [vmem:[#allocation2 + $0x90] sm:$0xff]
        %v650 = vld [vmem:[#allocation2 + $0x98] sm:$0xff]
        %v651 = vld [vmem:[#allocation2 + $0xa0] sm:$0xff]
        %v652 = vld [vmem:[#allocation2 + $0xa8] sm:$0xff]
        %v653 = vld [vmem:[#allocation2 + $0xb0] sm:$0xff]
        %v654 = vld [vmem:[#allocation2 + $0xb8] sm:$0xff]
        %v655 = vld [vmem:[#allocation2 + $0xc0] sm:$0xff]
        %v656 = vld [vmem:[#allocation2 + $0xc8] sm:$0xff]
        %v657 = vld [vmem:[#allocation2 + $0xd0] sm:$0xff]
        %v658 = vld [vmem:[#allocation2 + $0xd8] sm:$0xff]
        %v659 = vld [vmem:[#allocation2 + $0xe0] sm:$0xff]
        %v660 = vld [vmem:[#allocation2 + $0xe8] sm:$0xff]
        %v661 = vld [vmem:[#allocation2 + $0xf0] sm:$0xff]
        %v662 = vld [vmem:[#allocation2 + $0xf8] sm:$0xff]
        %v663 = vld [vmem:[#allocation2 + $0x100] sm:$0xff]
        %v664 = vld [vmem:[#allocation2 + $0x108] sm:$0xff]
        %v665 = vld [vmem:[#allocation2 + $0x110] sm:$0xff]
        %v666 = vld [vmem:[#allocation2 + $0x118] sm:$0xff]
        %v667 = vld [vmem:[#allocation2 + $0x120] sm:$0xff]
        %v668 = vld [vmem:[#allocation2 + $0x128] sm:$0xff]
        %v669 = vld [vmem:[#allocation2 + $0x130] sm:$0xff]
        %v670 = vld [vmem:[#allocation2 + $0x138] sm:$0xff]
        %v671 = vld [vmem:[#allocation2 + $0x140] sm:$0xff]
        %v672 = vld [vmem:[#allocation2 + $0x148] sm:$0xff]
        %v673 = vld [vmem:[#allocation2 + $0x150] sm:$0xff]
        %v674 = vld [vmem:[#allocation2 + $0x158] sm:$0xff]
        %v675 = vld [vmem:[#allocation2 + $0x160] sm:$0xff]
        %v676 = vld [vmem:[#allocation2 + $0x168] sm:$0xff]
        %v677 = vld [vmem:[#allocation2 + $0x170] sm:$0xff]
        %v678 = vld [vmem:[#allocation2 + $0x178] sm:$0xff]
        %v679 = vld [vmem:[#allocation2 + $0x180] sm:$0xff]
        %v680 = vld [vmem:[#allocation2 + $0x188] sm:$0xff]
        %v681 = vld [vmem:[#allocation2 + $0x190] sm:$0xff]
        %v682 = vld [vmem:[#allocation2 + $0x198] sm:$0xff]
        %v683 = vld [vmem:[#allocation2 + $0x1a0] sm:$0xff]
        %v684 = vld [vmem:[#allocation2 + $0x1a8] sm:$0xff]
        %v685 = vld [vmem:[#allocation2 + $0x1b0] sm:$0xff]
        %v686 = vld [vmem:[#allocation2 + $0x1b8] sm:$0xff]
        %v687 = vld [vmem:[#allocation2 + $0x1c0] sm:$0xff]
        %v688 = vld [vmem:[#allocation2 + $0x1c8] sm:$0xff]
        %v689 = vld [vmem:[#allocation2 + $0x1d0] sm:$0xff]
        %v690 = vld [vmem:[#allocation2 + $0x1d8] sm:$0xff]
        %v691 = vld [vmem:[#allocation2 + $0x1e0] sm:$0xff]
        %v692 = vld [vmem:[#allocation2 + $0x1e8] sm:$0xff]
        %v693 = vld [vmem:[#allocation2 + $0x1f0] sm:$0xff]
        %v694 = vld [vmem:[#allocation2 + $0x1f8] sm:$0xff]
        %v695 = vld [vmem:[#allocation2 + $0x200] sm:$0xff]
        %v696 = vld [vmem:[#allocation2 + $0x208] sm:$0xff]
        %v697 = vld [vmem:[#allocation2 + $0x210] sm:$0xff]
        %v698 = vld [vmem:[#allocation2 + $0x218] sm:$0xff]
        %v699 = vld [vmem:[#allocation2 + $0x220] sm:$0xff]
        %v700 = vld [vmem:[#allocation2 + $0x228] sm:$0xff]
        %v701 = vld [vmem:[#allocation2 + $0x230] sm:$0xff]
        %v702 = vld [vmem:[#allocation2 + $0x238] sm:$0xff]
        %v703 = vld [vmem:[#allocation2 + $0x240] sm:$0xff]
        %v704 = vld [vmem:[#allocation2 + $0x248] sm:$0xff]
        %v705 = vld [vmem:[#allocation2 + $0x250] sm:$0xff]
        %v706 = vld [vmem:[#allocation2 + $0x258] sm:$0xff]
        %v707 = vld [vmem:[#allocation2 + $0x260] sm:$0xff]
        %v708 = vld [vmem:[#allocation2 + $0x268] sm:$0xff]
        %v709 = vld [vmem:[#allocation2 + $0x270] sm:$0xff]
        %v710 = vld [vmem:[#allocation2 + $0x278] sm:$0xff]
        %v711 = vld [vmem:[#allocation2 + $0x280] sm:$0xff]
        %v712 = vld [vmem:[#allocation2 + $0x288] sm:$0xff]
        %v713 = vld [vmem:[#allocation2 + $0x290] sm:$0xff]
        %v714 = vld [vmem:[#allocation2 + $0x298] sm:$0xff]
        %v715 = vld [vmem:[#allocation2 + $0x2a0] sm:$0xff]
        %v716 = vld [vmem:[#allocation2 + $0x2a8] sm:$0xff]
        %v717 = vld [vmem:[#allocation2 + $0x2b0] sm:$0xff]
        %v718 = vld [vmem:[#allocation2 + $0x2b8] sm:$0xff]
        %v719 = vld [vmem:[#allocation2 + $0x2c0] sm:$0xff]
        %v720 = vld [vmem:[#allocation2 + $0x2c8] sm:$0xff]
        %v721 = vld [vmem:[#allocation2 + $0x2d0] sm:$0xff]
        %v722 = vld [vmem:[#allocation2 + $0x2d8] sm:$0xff]
        %v723 = vld [vmem:[#allocation2 + $0x2e0] sm:$0xff]
        %v724 = vld [vmem:[#allocation2 + $0x2e8] sm:$0xff]
        %v725 = vld [vmem:[#allocation2 + $0x2f0] sm:$0xff]
        %v726 = vld [vmem:[#allocation2 + $0x2f8] sm:$0xff]
        %v727 = vld [vmem:[#allocation2 + $0x300] sm:$0xff]
        %v728 = vld [vmem:[#allocation2 + $0x308] sm:$0xff]
        %v729 = vld [vmem:[#allocation2 + $0x310] sm:$0xff]
        %v730 = vld [vmem:[#allocation2 + $0x318] sm:$0xff]
        %v731 = vld [vmem:[#allocation2 + $0x320] sm:$0xff]
        %v732 = vld [vmem:[#allocation2 + $0x328] sm:$0xff]
        %v733 = vld [vmem:[#allocation2 + $0x330] sm:$0xff]
        %v734 = vld [vmem:[#allocation2 + $0x338] sm:$0xff]
        %v735 = vld [vmem:[#allocation2 + $0x340] sm:$0xff]
        %v736 = vld [vmem:[#allocation2 + $0x348] sm:$0xff]
        %v737 = vld [vmem:[#allocation2 + $0x350] sm:$0xff]
        %v738 = vld [vmem:[#allocation2 + $0x358] sm:$0xff]
        %v739 = vld [vmem:[#allocation2 + $0x360] sm:$0xff]
        %v740 = vld [vmem:[#allocation2 + $0x368] sm:$0xff]
        %v741 = vld [vmem:[#allocation2 + $0x370] sm:$0xff]
        %v742 = vld [vmem:[#allocation2 + $0x378] sm:$0xff]
        %v743 = vld [vmem:[#allocation2 + $0x380] sm:$0xff]
        %v744 = vld [vmem:[#allocation2 + $0x388] sm:$0xff]
        %v745 = vld [vmem:[#allocation2 + $0x390] sm:$0xff]
        %v746 = vld [vmem:[#allocation2 + $0x398] sm:$0xff]
        %v747 = vld [vmem:[#allocation2 + $0x3a0] sm:$0xff]
        %v748 = vld [vmem:[#allocation2 + $0x3a8] sm:$0xff]
        %v749 = vld [vmem:[#allocation2 + $0x3b0] sm:$0xff]
        %v750 = vld [vmem:[#allocation2 + $0x3b8] sm:$0xff]
        %v751 = vld [vmem:[#allocation2 + $0x3c0] sm:$0xff]
        %v752 = vld [vmem:[#allocation2 + $0x3c8] sm:$0xff]
        %v753 = vld [vmem:[#allocation2 + $0x3d0] sm:$0xff]
        %v754 = vld [vmem:[#allocation2 + $0x3d8] sm:$0xff]
        %v755 = vld [vmem:[#allocation2 + $0x3e0] sm:$0xff]
        %v756 = vld [vmem:[#allocation2 + $0x3e8] sm:$0xff]
        %v757 = vld [vmem:[#allocation2 + $0x3f0] sm:$0xff]
        %v758 = vld [vmem:[#allocation2 + $0x3f8] sm:$0xff]
        %v759 = vld [vmem:[%s6] sm:$0xff]
        %v761 = vlaneseq
        %v762 = vshrl.u32 %v761, 7
        %v763 = vsub.s32 0, %v762
        %v764 = vrot.slane %v759, %v763
        %v765 = vlaneseq
        %v766 = vshrl.u32 %v765, 7
        %v767 = vsub.s32 1, %v766
        %v768 = vrot.slane %v759, %v767
        %v769 = vlaneseq
        %v770 = vshrl.u32 %v769, 7
        %v771 = vsub.s32 2, %v770
        %v772 = vrot.slane %v759, %v771
        %v773 = vlaneseq
        %v774 = vshrl.u32 %v773, 7
        %v775 = vsub.s32 3, %v774
        %v776 = vrot.slane %v759, %v775
        %v777 = vlaneseq
        %v778 = vshrl.u32 %v777, 7
        %v779 = vsub.s32 4, %v778
        %v780 = vrot.slane %v759, %v779
        %v781 = vlaneseq
        %v782 = vshrl.u32 %v781, 7
        %v783 = vsub.s32 5, %v782
        %v784 = vrot.slane %v759, %v783
        %v785 = vlaneseq
        %v786 = vshrl.u32 %v785, 7
        %v787 = vsub.s32 6, %v786
        %v788 = vrot.slane %v759, %v787
        %v789 = vlaneseq
        %v790 = vshrl.u32 %v789, 7
        %v791 = vsub.s32 7, %v790
        %v792 = vrot.slane %v759, %v791
        %801 = vmatprep.subr.mxu0 %v632
        %802 = vmatpush1.msra.mxu0 %v631
        %803 = vmatprep.subr.mxu0 %v640
        %804 = vmatpush1.msra.mxu0 %v639
        %805 = vmatprep.subr.mxu0 %v648
        %806 = vmatpush1.msra.mxu0 %v647
        %807 = vmatprep.subr.mxu0 %v656
        %808 = vmatpush1.msra.mxu0 %v655
        %809 = vmatprep.subr.mxu0 %v664
        %810 = vmatpush1.msra.mxu0 %v663
        %811 = vmatprep.subr.mxu0 %v672
        %812 = vmatpush1.msra.mxu0 %v671
        %813 = vmatprep.subr.mxu0 %v680
        %814 = vmatpush1.msra.mxu0 %v679
        %815 = vmatprep.subr.mxu0 %v688
        %816 = vmatpush1.msra.mxu0 %v687
        %817 = vmatprep.subr.mxu0 %v696
        %818 = vmatpush1.msra.mxu0 %v695
        %819 = vmatprep.subr.mxu0 %v704
        %820 = vmatpush1.msra.mxu0 %v703
        %821 = vmatprep.subr.mxu0 %v712
        %822 = vmatpush1.msra.mxu0 %v711
        %823 = vmatprep.subr.mxu0 %v720
        %824 = vmatpush1.msra.mxu0 %v719
        %825 = vmatprep.subr.mxu0 %v728
        %826 = vmatpush1.msra.mxu0 %v727
        %827 = vmatprep.subr.mxu0 %v736
        %828 = vmatpush1.msra.mxu0 %v735
        %829 = vmatprep.subr.mxu0 %v744
        %830 = vmatpush1.msra.mxu0 %v743
        %831 = vmatprep.subr.mxu0 %v752
        %832 = vmatpush1.msra.mxu0 %v751
        %833 = vmatprep.subr.mxu0 0.0
        %834 = vmatpush1.msra.mxu0 0.0
        %835 = vmatprep.subr.mxu0 0.0
        %836 = vmatpush1.msra.mxu0 0.0
        %837 = vmatprep.subr.mxu0 0.0
        %838 = vmatpush1.msra.mxu0 0.0
        %839 = vmatprep.subr.mxu0 0.0
        %840 = vmatpush1.msra.mxu0 0.0
        %841 = vmatprep.subr.mxu0 0.0
        %842 = vmatpush1.msra.mxu0 0.0
        %843 = vmatprep.subr.mxu0 0.0
        %844 = vmatpush1.msra.mxu0 0.0
        %845 = vmatprep.subr.mxu0 0.0
        %846 = vmatpush1.msra.mxu0 0.0
        %847 = vmatprep.subr.mxu0 0.0
        %848 = vmatpush1.msra.mxu0 0.0
        %849 = vmatprep.subr.mxu0 0.0
        %850 = vmatpush1.msra.mxu0 0.0
        %851 = vmatprep.subr.mxu0 0.0
        %852 = vmatpush1.msra.mxu0 0.0
        %853 = vmatprep.subr.mxu0 0.0
        %854 = vmatpush1.msra.mxu0 0.0
        %855 = vmatprep.subr.mxu0 0.0
        %856 = vmatpush1.msra.mxu0 0.0
        %857 = vmatprep.subr.mxu0 0.0
        %858 = vmatpush1.msra.mxu0 0.0
        %859 = vmatprep.subr.mxu0 0.0
        %860 = vmatpush1.msra.mxu0 0.0
        %861 = vmatprep.subr.mxu0 0.0
        %862 = vmatpush1.msra.mxu0 0.0
        %863 = vmatprep.subr.mxu0 0.0
        %864 = vmatpush1.msra.mxu0 0.0
        %865 = vmatprep.mubr.f32.mxu0 0.0
        %866 = vmatmul.mubr.f32.gmra.mrb[0].mxu0 %v623
        %v867 = vpop.f32.mrb[0].mxu0
        %v868 = vadd.f32 %v764, %v867
        %v869 = vpop.f32.mrb[0].mxu0
        %v870 = vadd.f32 %v768, %v869
        %871 = vmatprep.mubr.f32.mxu0 0.0
        %872 = vmatmul.mubr.f32.gmra.mrb[0].mxu0 %v624
        %v873 = vpop.f32.mrb[0].mxu0
        %v874 = vadd.f32 %v764, %v873
        %v875 = vpop.f32.mrb[0].mxu0
        %v876 = vadd.f32 %v768, %v875
        %877 = vmatprep.mubr.f32.mxu0 0.0
        %878 = vmatmul.mubr.f32.gmra.mrb[0].mxu0 %v625
        %v879 = vpop.f32.mrb[0].mxu0
        %v880 = vadd.f32 %v764, %v879
        %v881 = vpop.f32.mrb[0].mxu0
        %v882 = vadd.f32 %v768, %v881
        %883 = vmatprep.mubr.f32.mxu0 0.0
        %884 = vmatmul.mubr.f32.gmra.mrb[0].mxu0 %v626
        %v885 = vpop.f32.mrb[0].mxu0
        %v886 = vadd.f32 %v764, %v885
        %v887 = vpop.f32.mrb[0].mxu0
        %v888 = vadd.f32 %v768, %v887
        %889 = vmatprep.mubr.f32.mxu0 0.0
        %890 = vmatmul.mubr.f32.gmra.mrb[0].mxu0 %v627
        %v891 = vpop.f32.mrb[0].mxu0
        %v892 = vadd.f32 %v764, %v891
        %v893 = vpop.f32.mrb[0].mxu0
        %v894 = vadd.f32 %v768, %v893
        %895 = vmatprep.mubr.f32.mxu0 0.0
        %896 = vmatmul.mubr.f32.gmra.mrb[0].mxu0 %v628
        %v897 = vpop.f32.mrb[0].mxu0
        %v898 = vadd.f32 %v764, %v897
        %v899 = vpop.f32.mrb[0].mxu0
        %v900 = vadd.f32 %v768, %v899
        %901 = vmatprep.mubr.f32.mxu0 0.0
        %902 = vmatmul.mubr.f32.gmra.mrb[0].mxu0 %v629
        %v903 = vpop.f32.mrb[0].mxu0
        %v904 = vadd.f32 %v764, %v903
        %v905 = vpop.f32.mrb[0].mxu0
        %v906 = vadd.f32 %v768, %v905
        %907 = vmatprep.mubr.f32.mxu0 0.0
        %908 = vmatmul.mubr.f32.gmra.mrb[0].mxu0 %v630
        %v909 = vpop.f32.mrb[0].mxu0
        %v910 = vadd.f32 %v764, %v909
        %v911 = vpop.f32.mrb[0].mxu0
        %v912 = vadd.f32 %v768, %v911
        %913 = vdwg.mxu0
        %914 = vmatprep.subr.mxu0 %v634
        %915 = vmatpush1.msra.mxu0 %v633
        %916 = vmatprep.subr.mxu0 %v642
        %917 = vmatpush1.msra.mxu0 %v641
        %918 = vmatprep.subr.mxu0 %v650
        %919 = vmatpush1.msra.mxu0 %v649
        %920 = vmatprep.subr.mxu0 %v658
        %921 = vmatpush1.msra.mxu0 %v657
        %922 = vmatprep.subr.mxu0 %v666
        %923 = vmatpush1.msra.mxu0 %v665
        %924 = vmatprep.subr.mxu0 %v674
        %925 = vmatpush1.msra.mxu0 %v673
        %926 = vmatprep.subr.mxu0 %v682
        %927 = vmatpush1.msra.mxu0 %v681
        %928 = vmatprep.subr.mxu0 %v690
        %929 = vmatpush1.msra.mxu0 %v689
        %930 = vmatprep.subr.mxu0 %v698
        %931 = vmatpush1.msra.mxu0 %v697
        %932 = vmatprep.subr.mxu0 %v706
        %933 = vmatpush1.msra.mxu0 %v705
        %934 = vmatprep.subr.mxu0 %v714
        %935 = vmatpush1.msra.mxu0 %v713
        %936 = vmatprep.subr.mxu0 %v722
        %937 = vmatpush1.msra.mxu0 %v721
        %938 = vmatprep.subr.mxu0 %v730
        %939 = vmatpush1.msra.mxu0 %v729
        %940 = vmatprep.subr.mxu0 %v738
        %941 = vmatpush1.msra.mxu0 %v737
        %942 = vmatprep.subr.mxu0 %v746
        %943 = vmatpush1.msra.mxu0 %v745
        %944 = vmatprep.subr.mxu0 %v754
        %945 = vmatpush1.msra.mxu0 %v753
        %946 = vmatprep.subr.mxu0 0.0
        %947 = vmatpush1.msra.mxu0 0.0
        %948 = vmatprep.subr.mxu0 0.0
        %949 = vmatpush1.msra.mxu0 0.0
        %950 = vmatprep.subr.mxu0 0.0
        %951 = vmatpush1.msra.mxu0 0.0
        %952 = vmatprep.subr.mxu0 0.0
        %953 = vmatpush1.msra.mxu0 0.0
        %954 = vmatprep.subr.mxu0 0.0
        %955 = vmatpush1.msra.mxu0 0.0
        %956 = vmatprep.subr.mxu0 0.0
        %957 = vmatpush1.msra.mxu0 0.0
        %958 = vmatprep.subr.mxu0 0.0
        %959 = vmatpush1.msra.mxu0 0.0
        %960 = vmatprep.subr.mxu0 0.0
        %961 = vmatpush1.msra.mxu0 0.0
        %962 = vmatprep.subr.mxu0 0.0
        %963 = vmatpush1.msra.mxu0 0.0
        %964 = vmatprep.subr.mxu0 0.0
        %965 = vmatpush1.msra.mxu0 0.0
        %966 = vmatprep.subr.mxu0 0.0
        %967 = vmatpush1.msra.mxu0 0.0
        %968 = vmatprep.subr.mxu0 0.0
        %969 = vmatpush1.msra.mxu0 0.0
        %970 = vmatprep.subr.mxu0 0.0
        %971 = vmatpush1.msra.mxu0 0.0
        %972 = vmatprep.subr.mxu0 0.0
        %973 = vmatpush1.msra.mxu0 0.0
        %974 = vmatprep.subr.mxu0 0.0
        %975 = vmatpush1.msra.mxu0 0.0
        %976 = vmatprep.subr.mxu0 0.0
        %977 = vmatpush1.msra.mxu0 0.0
        %978 = vmatprep.mubr.f32.mxu0 0.0
        %979 = vmatmul.mubr.f32.gmra.mrb[0].mxu0 %v623
        %v980 = vpop.f32.mrb[0].mxu0
        %v981 = vadd.f32 %v772, %v980
        %v982 = vpop.f32.mrb[0].mxu0
        %v983 = vadd.f32 %v776, %v982
        %984 = vmatprep.mubr.f32.mxu0 0.0
        %985 = vmatmul.mubr.f32.gmra.mrb[0].mxu0 %v624
        %v986 = vpop.f32.mrb[0].mxu0
        %v987 = vadd.f32 %v772, %v986
        %v988 = vpop.f32.mrb[0].mxu0
        %v989 = vadd.f32 %v776, %v988
        %990 = vmatprep.mubr.f32.mxu0 0.0
        %991 = vmatmul.mubr.f32.gmra.mrb[0].mxu0 %v625
        %v992 = vpop.f32.mrb[0].mxu0
        %v993 = vadd.f32 %v772, %v992
        %v994 = vpop.f32.mrb[0].mxu0
        %v995 = vadd.f32 %v776, %v994
        %996 = vmatprep.mubr.f32.mxu0 0.0
        %997 = vmatmul.mubr.f32.gmra.mrb[0].mxu0 %v626
        %v998 = vpop.f32.mrb[0].mxu0
        %v999 = vadd.f32 %v772, %v998
        %v1000 = vpop.f32.mrb[0].mxu0
        %v1001 = vadd.f32 %v776, %v1000
        %1002 = vmatprep.mubr.f32.mxu0 0.0
        %1003 = vmatmul.mubr.f32.gmra.mrb[0].mxu0 %v627
        %v1004 = vpop.f32.mrb[0].mxu0
        %v1005 = vadd.f32 %v772, %v1004
        %v1006 = vpop.f32.mrb[0].mxu0
        %v1007 = vadd.f32 %v776, %v1006
        %1008 = vmatprep.mubr.f32.mxu0 0.0
        %1009 = vmatmul.mubr.f32.gmra.mrb[0].mxu0 %v628
        %v1010 = vpop.f32.mrb[0].mxu0
        %v1011 = vadd.f32 %v772, %v1010
        %v1012 = vpop.f32.mrb[0].mxu0
        %v1013 = vadd.f32 %v776, %v1012
        %1014 = vmatprep.mubr.f32.mxu0 0.0
        %1015 = vmatmul.mubr.f32.gmra.mrb[0].mxu0 %v629
        %v1016 = vpop.f32.mrb[0].mxu0
        %v1017 = vadd.f32 %v772, %v1016
        %v1018 = vpop.f32.mrb[0].mxu0
        %v1019 = vadd.f32 %v776, %v1018
        %1020 = vmatprep.mubr.f32.mxu0 0.0
        %1021 = vmatmul.mubr.f32.gmra.mrb[0].mxu0 %v630
        %v1022 = vpop.f32.mrb[0].mxu0
        %v1023 = vadd.f32 %v772, %v1022
        %v1024 = vpop.f32.mrb[0].mxu0
        %v1025 = vadd.f32 %v776, %v1024
        %1026 = vdwg.mxu0
        %1027 = vmatprep.subr.mxu0 %v636
        %1028 = vmatpush1.msra.mxu0 %v635
        %1029 = vmatprep.subr.mxu0 %v644
        %1030 = vmatpush1.msra.mxu0 %v643
        %1031 = vmatprep.subr.mxu0 %v652
        %1032 = vmatpush1.msra.mxu0 %v651
        %1033 = vmatprep.subr.mxu0 %v660
        %1034 = vmatpush1.msra.mxu0 %v659
        %1035 = vmatprep.subr.mxu0 %v668
        %1036 = vmatpush1.msra.mxu0 %v667
        %1037 = vmatprep.subr.mxu0 %v676
        %1038 = vmatpush1.msra.mxu0 %v675
        %1039 = vmatprep.subr.mxu0 %v684
        %1040 = vmatpush1.msra.mxu0 %v683
        %1041 = vmatprep.subr.mxu0 %v692
        %1042 = vmatpush1.msra.mxu0 %v691
        %1043 = vmatprep.subr.mxu0 %v700
        %1044 = vmatpush1.msra.mxu0 %v699
        %1045 = vmatprep.subr.mxu0 %v708
        %1046 = vmatpush1.msra.mxu0 %v707
        %1047 = vmatprep.subr.mxu0 %v716
        %1048 = vmatpush1.msra.mxu0 %v715
        %1049 = vmatprep.subr.mxu0 %v724
        %1050 = vmatpush1.msra.mxu0 %v723
        %1051 = vmatprep.subr.mxu0 %v732
        %1052 = vmatpush1.msra.mxu0 %v731
        %1053 = vmatprep.subr.mxu0 %v740
        %1054 = vmatpush1.msra.mxu0 %v739
        %1055 = vmatprep.subr.mxu0 %v748
        %1056 = vmatpush1.msra.mxu0 %v747
        %1057 = vmatprep.subr.mxu0 %v756
        %1058 = vmatpush1.msra.mxu0 %v755
        %1059 = vmatprep.subr.mxu0 0.0
        %1060 = vmatpush1.msra.mxu0 0.0
        %1061 = vmatprep.subr.mxu0 0.0
        %1062 = vmatpush1.msra.mxu0 0.0
        %1063 = vmatprep.subr.mxu0 0.0
        %1064 = vmatpush1.msra.mxu0 0.0
        %1065 = vmatprep.subr.mxu0 0.0
        %1066 = vmatpush1.msra.mxu0 0.0
        %1067 = vmatprep.subr.mxu0 0.0
        %1068 = vmatpush1.msra.mxu0 0.0
        %1069 = vmatprep.subr.mxu0 0.0
        %1070 = vmatpush1.msra.mxu0 0.0
        %1071 = vmatprep.subr.mxu0 0.0
        %1072 = vmatpush1.msra.mxu0 0.0
        %1073 = vmatprep.subr.mxu0 0.0
        %1074 = vmatpush1.msra.mxu0 0.0
        %1075 = vmatprep.subr.mxu0 0.0
        %1076 = vmatpush1.msra.mxu0 0.0
        %1077 = vmatprep.subr.mxu0 0.0
        %1078 = vmatpush1.msra.mxu0 0.0
        %1079 = vmatprep.subr.mxu0 0.0
        %1080 = vmatpush1.msra.mxu0 0.0
        %1081 = vmatprep.subr.mxu0 0.0
        %1082 = vmatpush1.msra.mxu0 0.0
        %1083 = vmatprep.subr.mxu0 0.0
        %1084 = vmatpush1.msra.mxu0 0.0
        %1085 = vmatprep.subr.mxu0 0.0
        %1086 = vmatpush1.msra.mxu0 0.0
        %1087 = vmatprep.subr.mxu0 0.0
        %1088 = vmatpush1.msra.mxu0 0.0
        %1089 = vmatprep.subr.mxu0 0.0
        %1090 = vmatpush1.msra.mxu0 0.0
        %1091 = vmatprep.mubr.f32.mxu0 0.0
        %1092 = vmatmul.mubr.f32.gmra.mrb[0].mxu0 %v623
        %v1093 = vpop.f32.mrb[0].mxu0
        %v1094 = vadd.f32 %v780, %v1093
        %v1095 = vpop.f32.mrb[0].mxu0
        %v1096 = vadd.f32 %v784, %v1095
        %1097 = vmatprep.mubr.f32.mxu0 0.0
        %1098 = vmatmul.mubr.f32.gmra.mrb[0].mxu0 %v624
        %v1099 = vpop.f32.mrb[0].mxu0
        %v1100 = vadd.f32 %v780, %v1099
        %v1101 = vpop.f32.mrb[0].mxu0
        %v1102 = vadd.f32 %v784, %v1101
        %1103 = vmatprep.mubr.f32.mxu0 0.0
        %1104 = vmatmul.mubr.f32.gmra.mrb[0].mxu0 %v625
        %v1105 = vpop.f32.mrb[0].mxu0
        %v1106 = vadd.f32 %v780, %v1105
        %v1107 = vpop.f32.mrb[0].mxu0
        %v1108 = vadd.f32 %v784, %v1107
        %1109 = vmatprep.mubr.f32.mxu0 0.0
        %1110 = vmatmul.mubr.f32.gmra.mrb[0].mxu0 %v626
        %v1111 = vpop.f32.mrb[0].mxu0
        %v1112 = vadd.f32 %v780, %v1111
        %v1113 = vpop.f32.mrb[0].mxu0
        %v1114 = vadd.f32 %v784, %v1113
        %1115 = vmatprep.mubr.f32.mxu0 0.0
        %1116 = vmatmul.mubr.f32.gmra.mrb[0].mxu0 %v627
        %v1117 = vpop.f32.mrb[0].mxu0
        %v1118 = vadd.f32 %v780, %v1117
        %v1119 = vpop.f32.mrb[0].mxu0
        %v1120 = vadd.f32 %v784, %v1119
        %1121 = vmatprep.mubr.f32.mxu0 0.0
        %1122 = vmatmul.mubr.f32.gmra.mrb[0].mxu0 %v628
        %v1123 = vpop.f32.mrb[0].mxu0
        %v1124 = vadd.f32 %v780, %v1123
        %v1125 = vpop.f32.mrb[0].mxu0
        %v1126 = vadd.f32 %v784, %v1125
        %1127 = vmatprep.mubr.f32.mxu0 0.0
        %1128 = vmatmul.mubr.f32.gmra.mrb[0].mxu0 %v629
        %v1129 = vpop.f32.mrb[0].mxu0
        %v1130 = vadd.f32 %v780, %v1129
        %v1131 = vpop.f32.mrb[0].mxu0
        %v1132 = vadd.f32 %v784, %v1131
        %1133 = vmatprep.mubr.f32.mxu0 0.0
        %1134 = vmatmul.mubr.f32.gmra.mrb[0].mxu0 %v630
        %v1135 = vpop.f32.mrb[0].mxu0
        %v1136 = vadd.f32 %v780, %v1135
        %v1137 = vpop.f32.mrb[0].mxu0
        %v1138 = vadd.f32 %v784, %v1137
        %1139 = vdwg.mxu0
        %1140 = vmatprep.subr.mxu0 %v638
        %1141 = vmatpush1.msra.mxu0 %v637
        %1142 = vmatprep.subr.mxu0 %v646
        %1143 = vmatpush1.msra.mxu0 %v645
        %1144 = vmatprep.subr.mxu0 %v654
        %1145 = vmatpush1.msra.mxu0 %v653
        %1146 = vmatprep.subr.mxu0 %v662
        %1147 = vmatpush1.msra.mxu0 %v661
        %1148 = vmatprep.subr.mxu0 %v670
        %1149 = vmatpush1.msra.mxu0 %v669
        %1150 = vmatprep.subr.mxu0 %v678
        %1151 = vmatpush1.msra.mxu0 %v677
        %1152 = vmatprep.subr.mxu0 %v686
        %1153 = vmatpush1.msra.mxu0 %v685
        %1154 = vmatprep.subr.mxu0 %v694
        %1155 = vmatpush1.msra.mxu0 %v693
        %1156 = vmatprep.subr.mxu0 %v702
        %1157 = vmatpush1.msra.mxu0 %v701
        %1158 = vmatprep.subr.mxu0 %v710
        %1159 = vmatpush1.msra.mxu0 %v709
        %1160 = vmatprep.subr.mxu0 %v718
        %1161 = vmatpush1.msra.mxu0 %v717
        %1162 = vmatprep.subr.mxu0 %v726
        %1163 = vmatpush1.msra.mxu0 %v725
        %1164 = vmatprep.subr.mxu0 %v734
        %1165 = vmatpush1.msra.mxu0 %v733
        %1166 = vmatprep.subr.mxu0 %v742
        %1167 = vmatpush1.msra.mxu0 %v741
        %1168 = vmatprep.subr.mxu0 %v750
        %1169 = vmatpush1.msra.mxu0 %v749
        %1170 = vmatprep.subr.mxu0 %v758
        %1171 = vmatpush1.msra.mxu0 %v757
        %1172 = vmatprep.subr.mxu0 0.0
        %1173 = vmatpush1.msra.mxu0 0.0
        %1174 = vmatprep.subr.mxu0 0.0
        %1175 = vmatpush1.msra.mxu0 0.0
        %1176 = vmatprep.subr.mxu0 0.0
        %1177 = vmatpush1.msra.mxu0 0.0
        %1178 = vmatprep.subr.mxu0 0.0
        %1179 = vmatpush1.msra.mxu0 0.0
        %1180 = vmatprep.subr.mxu0 0.0
        %1181 = vmatpush1.msra.mxu0 0.0
        %1182 = vmatprep.subr.mxu0 0.0
        %1183 = vmatpush1.msra.mxu0 0.0
        %1184 = vmatprep.subr.mxu0 0.0
        %1185 = vmatpush1.msra.mxu0 0.0
        %1186 = vmatprep.subr.mxu0 0.0
        %1187 = vmatpush1.msra.mxu0 0.0
        %1188 = vmatprep.subr.mxu0 0.0
        %1189 = vmatpush1.msra.mxu0 0.0
        %1190 = vmatprep.subr.mxu0 0.0
        %1191 = vmatpush1.msra.mxu0 0.0
        %1192 = vmatprep.subr.mxu0 0.0
        %1193 = vmatpush1.msra.mxu0 0.0
        %1194 = vmatprep.subr.mxu0 0.0
        %1195 = vmatpush1.msra.mxu0 0.0
        %1196 = vmatprep.subr.mxu0 0.0
        %1197 = vmatpush1.msra.mxu0 0.0
        %1198 = vmatprep.subr.mxu0 0.0
        %1199 = vmatpush1.msra.mxu0 0.0
        %1200 = vmatprep.subr.mxu0 0.0
        %1201 = vmatpush1.msra.mxu0 0.0
        %1202 = vmatprep.subr.mxu0 0.0
        %1203 = vmatpush1.msra.mxu0 0.0
        %1204 = vmatprep.mubr.f32.mxu0 0.0
        %1205 = vmatmul.mubr.f32.gmra.mrb[0].mxu0 %v623
        %v1206 = vpop.f32.mrb[0].mxu0
        %v1207 = vadd.f32 %v788, %v1206
        %v1208 = vpop.f32.mrb[0].mxu0
        %v1209 = vadd.f32 %v792, %v1208
        %1210 = vmatprep.mubr.f32.mxu0 0.0
        %1211 = vmatmul.mubr.f32.gmra.mrb[0].mxu0 %v624
        %v1212 = vpop.f32.mrb[0].mxu0
        %v1213 = vadd.f32 %v788, %v1212
        %v1214 = vpop.f32.mrb[0].mxu0
        %v1215 = vadd.f32 %v792, %v1214
        %1216 = vmatprep.mubr.f32.mxu0 0.0
        %1217 = vmatmul.mubr.f32.gmra.mrb[0].mxu0 %v625
        %v1218 = vpop.f32.mrb[0].mxu0
        %v1219 = vadd.f32 %v788, %v1218
        %v1220 = vpop.f32.mrb[0].mxu0
        %v1221 = vadd.f32 %v792, %v1220
        %1222 = vmatprep.mubr.f32.mxu0 0.0
        %1223 = vmatmul.mubr.f32.gmra.mrb[0].mxu0 %v626
        %v1224 = vpop.f32.mrb[0].mxu0
        %v1225 = vadd.f32 %v788, %v1224
        %v1226 = vpop.f32.mrb[0].mxu0
        %v1227 = vadd.f32 %v792, %v1226
        %1228 = vmatprep.mubr.f32.mxu0 0.0
        %1229 = vmatmul.mubr.f32.gmra.mrb[0].mxu0 %v627
        %v1230 = vpop.f32.mrb[0].mxu0
        %v1231 = vadd.f32 %v788, %v1230
        %v1232 = vpop.f32.mrb[0].mxu0
        %v1233 = vadd.f32 %v792, %v1232
        %1234 = vmatprep.mubr.f32.mxu0 0.0
        %1235 = vmatmul.mubr.f32.gmra.mrb[0].mxu0 %v628
        %v1236 = vpop.f32.mrb[0].mxu0
        %v1237 = vadd.f32 %v788, %v1236
        %v1238 = vpop.f32.mrb[0].mxu0
        %v1239 = vadd.f32 %v792, %v1238
        %1240 = vmatprep.mubr.f32.mxu0 0.0
        %1241 = vmatmul.mubr.f32.gmra.mrb[0].mxu0 %v629
        %v1242 = vpop.f32.mrb[0].mxu0
        %v1243 = vadd.f32 %v788, %v1242
        %v1244 = vpop.f32.mrb[0].mxu0
        %v1245 = vadd.f32 %v792, %v1244
        %1246 = vmatprep.mubr.f32.mxu0 0.0
        %1247 = vmatmul.mubr.f32.gmra.mrb[0].mxu0 %v630
        %v1248 = vpop.f32.mrb[0].mxu0
        %v1249 = vadd.f32 %v788, %v1248
        %v1250 = vpop.f32.mrb[0].mxu0
        %v1251 = vadd.f32 %v792, %v1250
        %1252 = vdwg.mxu0
        %v1253 = vmax.f32 %v868, 0.0
        %v1254 = vmax.f32 %v870, 0.0
        %v1255 = vmax.f32 %v981, 0.0
        %v1256 = vmax.f32 %v983, 0.0
        %v1257 = vmax.f32 %v1094, 0.0
        %v1258 = vmax.f32 %v1096, 0.0
        %v1259 = vmax.f32 %v1207, 0.0
        %v1260 = vmax.f32 %v1209, 0.0
        %v1261 = vmax.f32 %v874, 0.0
        %v1262 = vmax.f32 %v876, 0.0
        %v1263 = vmax.f32 %v987, 0.0
        %v1264 = vmax.f32 %v989, 0.0
        %v1265 = vmax.f32 %v1100, 0.0
        %v1266 = vmax.f32 %v1102, 0.0
        %v1267 = vmax.f32 %v1213, 0.0
        %v1268 = vmax.f32 %v1215, 0.0
        %v1269 = vmax.f32 %v880, 0.0
        %v1270 = vmax.f32 %v882, 0.0
        %v1271 = vmax.f32 %v993, 0.0
        %v1272 = vmax.f32 %v995, 0.0
        %v1273 = vmax.f32 %v1106, 0.0
        %v1274 = vmax.f32 %v1108, 0.0
        %v1275 = vmax.f32 %v1219, 0.0
        %v1276 = vmax.f32 %v1221, 0.0
        %v1277 = vmax.f32 %v886, 0.0
        %v1278 = vmax.f32 %v888, 0.0
        %v1279 = vmax.f32 %v999, 0.0
        %v1280 = vmax.f32 %v1001, 0.0
        %v1281 = vmax.f32 %v1112, 0.0
        %v1282 = vmax.f32 %v1114, 0.0
        %v1283 = vmax.f32 %v1225, 0.0
        %v1284 = vmax.f32 %v1227, 0.0
        %v1285 = vmax.f32 %v892, 0.0
        %v1286 = vmax.f32 %v894, 0.0
        %v1287 = vmax.f32 %v1005, 0.0
        %v1288 = vmax.f32 %v1007, 0.0
        %v1289 = vmax.f32 %v1118, 0.0
        %v1290 = vmax.f32 %v1120, 0.0
        %v1291 = vmax.f32 %v1231, 0.0
        %v1292 = vmax.f32 %v1233, 0.0
        %v1293 = vmax.f32 %v898, 0.0
        %v1294 = vmax.f32 %v900, 0.0
        %v1295 = vmax.f32 %v1011, 0.0
        %v1296 = vmax.f32 %v1013, 0.0
        %v1297 = vmax.f32 %v1124, 0.0
        %v1298 = vmax.f32 %v1126, 0.0
        %v1299 = vmax.f32 %v1237, 0.0
        %v1300 = vmax.f32 %v1239, 0.0
        %v1301 = vmax.f32 %v904, 0.0
        %v1302 = vmax.f32 %v906, 0.0
        %v1303 = vmax.f32 %v1017, 0.0
        %v1304 = vmax.f32 %v1019, 0.0
        %v1305 = vmax.f32 %v1130, 0.0
        %v1306 = vmax.f32 %v1132, 0.0
        %v1307 = vmax.f32 %v1243, 0.0
        %v1308 = vmax.f32 %v1245, 0.0
        %v1309 = vmax.f32 %v910, 0.0
        %v1310 = vmax.f32 %v912, 0.0
        %v1311 = vmax.f32 %v1023, 0.0
        %v1312 = vmax.f32 %v1025, 0.0
        %v1313 = vmax.f32 %v1136, 0.0
        %v1314 = vmax.f32 %v1138, 0.0
        %v1315 = vmax.f32 %v1249, 0.0
        %v1316 = vmax.f32 %v1251, 0.0
        %v1317 = vmax.f32 %v1253, %v1261
        %v1318 = vmax.f32 %v1317, %v1269
        %v1319 = vmax.f32 %v1318, %v1277
        %v1320 = vmax.f32 %v1319, %v1285
        %v1321 = vmax.f32 %v1320, %v1293
        %v1322 = vmax.f32 %v1321, %v1301
        %v1323 = vmax.f32 %v1322, %v1309
        %v1324 = vrot.slane %v1323, 4
        %v1325 = vmax.f32 %v1323, %v1324
        %v1326 = vrot.slane %v1325, 2
        %v1327 = vmax.f32 %v1325, %v1326
        %v1328 = vrot.slane %v1327, 1
        %v1329 = vmax.f32 %v1327, %v1328
        %v1330 = vmax.f32 %v1254, %v1262
        %v1331 = vmax.f32 %v1330, %v1270
        %v1332 = vmax.f32 %v1331, %v1278
        %v1333 = vmax.f32 %v1332, %v1286
        %v1334 = vmax.f32 %v1333, %v1294
        %v1335 = vmax.f32 %v1334, %v1302
        %v1336 = vmax.f32 %v1335, %v1310
        %v1337 = vrot.slane %v1336, 4
        %v1338 = vmax.f32 %v1336, %v1337
        %v1339 = vrot.slane %v1338, 2
        %v1340 = vmax.f32 %v1338, %v1339
        %v1341 = vrot.slane %v1340, 1
        %v1342 = vmax.f32 %v1340, %v1341
        %v1343 = vmax.f32 %v1255, %v1263
        %v1344 = vmax.f32 %v1343, %v1271
        %v1345 = vmax.f32 %v1344, %v1279
        %v1346 = vmax.f32 %v1345, %v1287
        %v1347 = vmax.f32 %v1346, %v1295
        %v1348 = vmax.f32 %v1347, %v1303
        %v1349 = vmax.f32 %v1348, %v1311
        %v1350 = vrot.slane %v1349, 4
        %v1351 = vmax.f32 %v1349, %v1350
        %v1352 = vrot.slane %v1351, 2
        %v1353 = vmax.f32 %v1351, %v1352
        %v1354 = vrot.slane %v1353, 1
        %v1355 = vmax.f32 %v1353, %v1354
        %v1356 = vmax.f32 %v1256, %v1264
        %v1357 = vmax.f32 %v1356, %v1272
        %v1358 = vmax.f32 %v1357, %v1280
        %v1359 = vmax.f32 %v1358, %v1288
        %v1360 = vmax.f32 %v1359, %v1296
        %v1361 = vmax.f32 %v1360, %v1304
        %v1362 = vmax.f32 %v1361, %v1312
        %v1363 = vrot.slane %v1362, 4
        %v1364 = vmax.f32 %v1362, %v1363
        %v1365 = vrot.slane %v1364, 2
        %v1366 = vmax.f32 %v1364, %v1365
        %v1367 = vrot.slane %v1366, 1
        %v1368 = vmax.f32 %v1366, %v1367
        %v1369 = vmax.f32 %v1257, %v1265
        %v1370 = vmax.f32 %v1369, %v1273
        %v1371 = vmax.f32 %v1370, %v1281
        %v1372 = vmax.f32 %v1371, %v1289
        %v1373 = vmax.f32 %v1372, %v1297
        %v1374 = vmax.f32 %v1373, %v1305
        %v1375 = vmax.f32 %v1374, %v1313
        %v1376 = vrot.slane %v1375, 4
        %v1377 = vmax.f32 %v1375, %v1376
        %v1378 = vrot.slane %v1377, 2
        %v1379 = vmax.f32 %v1377, %v1378
        %v1380 = vrot.slane %v1379, 1
        %v1381 = vmax.f32 %v1379, %v1380
        %v1382 = vmax.f32 %v1258, %v1266
        %v1383 = vmax.f32 %v1382, %v1274
        %v1384 = vmax.f32 %v1383, %v1282
        %v1385 = vmax.f32 %v1384, %v1290
        %v1386 = vmax.f32 %v1385, %v1298
        %v1387 = vmax.f32 %v1386, %v1306
        %v1388 = vmax.f32 %v1387, %v1314
        %v1389 = vrot.slane %v1388, 4
        %v1390 = vmax.f32 %v1388, %v1389
        %v1391 = vrot.slane %v1390, 2
        %v1392 = vmax.f32 %v1390, %v1391
        %v1393 = vrot.slane %v1392, 1
        %v1394 = vmax.f32 %v1392, %v1393
        %v1395 = vmax.f32 %v1259, %v1267
        %v1396 = vmax.f32 %v1395, %v1275
        %v1397 = vmax.f32 %v1396, %v1283
        %v1398 = vmax.f32 %v1397, %v1291
        %v1399 = vmax.f32 %v1398, %v1299
        %v1400 = vmax.f32 %v1399, %v1307
        %v1401 = vmax.f32 %v1400, %v1315
        %v1402 = vrot.slane %v1401, 4
        %v1403 = vmax.f32 %v1401, %v1402
        %v1404 = vrot.slane %v1403, 2
        %v1405 = vmax.f32 %v1403, %v1404
        %v1406 = vrot.slane %v1405, 1
        %v1407 = vmax.f32 %v1405, %v1406
        %v1408 = vmax.f32 %v1260, %v1268
        %v1409 = vmax.f32 %v1408, %v1276
        %v1410 = vmax.f32 %v1409, %v1284
        %v1411 = vmax.f32 %v1410, %v1292
        %v1412 = vmax.f32 %v1411, %v1300
        %v1413 = vmax.f32 %v1412, %v1308
        %v1414 = vmax.f32 %v1413, %v1316
        %v1415 = vrot.slane %v1414, 4
        %v1416 = vmax.f32 %v1414, %v1415
        %v1417 = vrot.slane %v1416, 2
        %v1418 = vmax.f32 %v1416, %v1417
        %v1419 = vrot.slane %v1418, 1
        %v1420 = vmax.f32 %v1418, %v1419
        %p1421 = scmp.eq.s32.totalorder %s27, 0
        // Predicated region
        $region53: #{tpu_custom_call.1} parent=47 // pred_check
          %p1422 = pneg %p1421
        $region54: #{tpu_custom_call.1} parent=47 // pred_check_branch
          %1424 = sbr.rel (%p1422) target = $region56
        $region55: #{tpu_custom_call.1} parent=47 // pred_region
          %v1433 = vcombine.low %v1329, %v1342
          %v1434 = vcombine.low %v1355, %v1368
          %v1435 = vcombine.low %v1381, %v1394
          %v1436 = vcombine.low %v1407, %v1420
          %v1438 = vunpack.c.l.s4 1966171168
          %v1439 = vunpack.c.0.s8 %v1438
          %v1440 = vlaneseq
          %v1441 = vshrl.u32 %v1440, 7
          %v1442 = vsub.s32 %v1439, %v1441
          %v1443 = vrot.slane %v1433, %v1442
          %v1445 = vunpack.c.l.s4 1966171168
          %v1446 = vunpack.c.0.s8 %v1445
          %v1447 = vlaneseq
          %v1448 = vshrl.u32 %v1447, 7
          %v1449 = vsub.s32 %v1446, %v1448
          %v1450 = vrot.slane %v1434, %v1449
          %v1452 = vunpack.c.l.s4 1966171168
          %v1453 = vunpack.c.0.s8 %v1452
          %v1454 = vlaneseq
          %v1455 = vshrl.u32 %v1454, 7
          %v1456 = vsub.s32 %v1453, %v1455
          %v1457 = vrot.slane %v1435, %v1456
          %v1459 = vunpack.c.l.s4 1966171168
          %v1460 = vunpack.c.0.s8 %v1459
          %v1461 = vlaneseq
          %v1462 = vshrl.u32 %v1461, 7
          %v1463 = vsub.s32 %v1460, %v1462
          %v1464 = vrot.slane %v1436, %v1463
          %v1465 = vcombine.low %v1443, %v1450
          %v1466 = vcombine.low %v1457, %v1464
          %v1468 = vunpack.c.l.s4 1966171168
          %v1469 = vunpack.c.0.s8 %v1468
          %v1470 = vlaneseq
          %v1471 = vshrl.u32 %v1470, 7
          %v1472 = vsub.s32 %v1469, %v1471
          %v1473 = vrot.slane %v1465, %v1472
          %v1475 = vunpack.c.l.s4 1966171168
          %v1476 = vunpack.c.0.s8 %v1475
          %v1477 = vlaneseq
          %v1478 = vshrl.u32 %v1477, 7
          %v1479 = vsub.s32 %v1476, %v1478
          %v1480 = vrot.slane %v1466, %v1479
          %v1481 = vcombine.low %v1473, %v1480
          %1483 = vst [vmem:[%s309] sm:$0xff] %v1481
        $region56: #{tpu_custom_call.1} parent=47 // pred_fallthru
          _
        %p1484 = scmp.gt.s32.totalorder %s27, 0
        // Predicated region
        $region57: #{tpu_custom_call.1} parent=47 // pred_check
          %p1485 = pneg %p1484
        $region58: #{tpu_custom_call.1} parent=47 // pred_check_branch
          %1487 = sbr.rel (%p1485) target = $region60
        $region59: #{tpu_custom_call.1} parent=47 // pred_region
          %v1488 = vld [vmem:[%s309] sm:$0xff]
          %v1497 = vcombine.low %v1329, %v1342
          %v1498 = vcombine.low %v1355, %v1368
          %v1499 = vcombine.low %v1381, %v1394
          %v1500 = vcombine.low %v1407, %v1420
          %v1502 = vunpack.c.l.s4 1966171168
          %v1503 = vunpack.c.0.s8 %v1502
          %v1504 = vlaneseq
          %v1505 = vshrl.u32 %v1504, 7
          %v1506 = vsub.s32 %v1503, %v1505
          %v1507 = vrot.slane %v1497, %v1506
          %v1509 = vunpack.c.l.s4 1966171168
          %v1510 = vunpack.c.0.s8 %v1509
          %v1511 = vlaneseq
          %v1512 = vshrl.u32 %v1511, 7
          %v1513 = vsub.s32 %v1510, %v1512
          %v1514 = vrot.slane %v1498, %v1513
          %v1516 = vunpack.c.l.s4 1966171168
          %v1517 = vunpack.c.0.s8 %v1516
          %v1518 = vlaneseq
          %v1519 = vshrl.u32 %v1518, 7
          %v1520 = vsub.s32 %v1517, %v1519
          %v1521 = vrot.slane %v1499, %v1520
          %v1523 = vunpack.c.l.s4 1966171168
          %v1524 = vunpack.c.0.s8 %v1523
          %v1525 = vlaneseq
          %v1526 = vshrl.u32 %v1525, 7
          %v1527 = vsub.s32 %v1524, %v1526
          %v1528 = vrot.slane %v1500, %v1527
          %v1529 = vcombine.low %v1507, %v1514
          %v1530 = vcombine.low %v1521, %v1528
          %v1532 = vunpack.c.l.s4 1966171168
          %v1533 = vunpack.c.0.s8 %v1532
          %v1534 = vlaneseq
          %v1535 = vshrl.u32 %v1534, 7
          %v1536 = vsub.s32 %v1533, %v1535
          %v1537 = vrot.slane %v1529, %v1536
          %v1539 = vunpack.c.l.s4 1966171168
          %v1540 = vunpack.c.0.s8 %v1539
          %v1541 = vlaneseq
          %v1542 = vshrl.u32 %v1541, 7
          %v1543 = vsub.s32 %v1540, %v1542
          %v1544 = vrot.slane %v1530, %v1543
          %v1545 = vcombine.low %v1537, %v1544
          %v1547 = vmax.f32 %v1488, %v1545
          %1548 = vst [vmem:[%s309] sm:$0xff] %v1547
        $region60: #{tpu_custom_call.1} parent=47 // pred_fallthru
          _
        %s1549 = sand.u32 %s196, 1
        %s1550 = scalar_lea.sflag [#allocation4], %s1549
        %s1551 = sand.u32 %s196, 1
        %s1552 = smul.addr %s1551, 8
        %s1553 = scalar_lea.vmem [#allocation5], %s1552
        // Predicated region
        $region61: #{tpu_custom_call.1} parent=47 // pred_check
          %p1554 = pneg %p206
        $region62: #{tpu_custom_call.1} parent=47 // pred_check_branch
          %1556 = sbr.rel (%p1554) target = $region64
        $region63: #{tpu_custom_call.1} parent=47 // pred_region
          %s1558 = ssub.s32 128, 128
          %1559 = vsyncadd %s1550, %s1558
          %s1560 = smul.addr %s26, 8
          %s1561 = smul.addr %s1560, 16
          %s1562 = scalar_lea.hbm %s7, %s1561
          %s1564 = sshll.u32 %s1553, 4
          %s1565 = int_to_ptr.vmem [resolvable:$true] %s1564
          %1567 = dma.vmem_to_hbm [thread:$0]  %s1565, 128, %s1562, %s1550
        $region64: #{tpu_custom_call.1} parent=47 // pred_fallthru
          _
      $region48: #{tpu_custom_call.1} parent=5 // pred_fallthru
        _
      %p1568 = scmp.le.s32.totalorder 2, %s17
      // Predicated region
      $region65: #{tpu_custom_call.1} parent=5 // pred_check
        %p1569 = pneg %p1568
      $region66: #{tpu_custom_call.1} parent=5 // pred_check_branch
        %1571 = sbr.rel (%p1569) target = $region68
      $region67: #{tpu_custom_call.1} parent=5 // pred_region
        %s1572 = ssub.s32 %s17, 2
        // Predicated region
        $region69: #{tpu_custom_call.1} parent=67 // pred_check
          %p1573 = pneg %p212
        $region70: #{tpu_custom_call.1} parent=67 // pred_check_branch
          %1575 = sbr.rel (%p1573) target = $region72
        $region71: #{tpu_custom_call.1} parent=67 // pred_region
          %s1576 = sand.u32 %s197, 1
          %s1577 = scalar_lea.sflag [#allocation4], %s1576
          %s1578 = sand.u32 %s197, 1
          %s1579 = smul.addr %s1578, 8
          %s1580 = scalar_lea.vmem [#allocation5], %s1579
          %1581 = dma.done %s1577, 128
        $region72: #{tpu_custom_call.1} parent=67 // pred_fallthru
          _
      $region68: #{tpu_custom_call.1} parent=5 // pred_fallthru
        _
    $region6: #{tpu_custom_call.1} parent=1 // loop_footer
      %s21 = sadd.s32 1, %s17
    $region7: #{tpu_custom_call.1} parent=1 // loop_footer_branch
      %16 = sbr.rel target = $region3
    $region8: #{tpu_custom_call.1} parent=1 // loop_exit
      _
    %1582 = vsyncpa [#allocation3], 1
    %s1583 = scalar_lea.sflag [#allocation3], 1
    %1584 = vsyncpa %s1583, 1
    %1585 = vsyncpa [#allocation4], 1
    %s1586 = scalar_lea.sflag [#allocation4], 1
    %1587 = vsyncpa %s1586, 1

</llo_original>
